<compile_context>
chip_gen: v5e
topology: v5e:2x2
jax: 0.10.0
libtpu: 0.0.40
codegen_flags: <defaults>
</compile_context>

<pallas_src>
import functools

import numpy as np

import jax
import jax.numpy as jnp
from jax.experimental import pallas as pl
from jax.experimental.pallas import tpu as pltpu


# ----------------------------------------------------------------------------
# Constant-matrix builders (host side, run once at parameter-init time).
# ----------------------------------------------------------------------------
def _pool_matrix(h, w):
    """(h*w, h/2*w/2) matrix implementing AvgPool2d(2,2) on flattened maps."""
    m = np.zeros((h * w, (h // 2) * (w // 2)), np.float32)
    for i in range(h):
        for j in range(w):
            m[i * w + j, (i // 2) * (w // 2) + (j // 2)] = 0.25
    return m


def _tap_matrices(h, w, k):
    """(k*k, h*w, h*w) selection matrices for a k x k replicate-padded conv."""
    pad = k // 2
    m = np.zeros((k * k, h * w, h * w), np.float32)
    for di in range(k):
        for dj in range(k):
            t = di * k + dj
            for i in range(h):
                for j in range(w):
                    si = min(max(i + di - pad, 0), h - 1)
                    sj = min(max(j + dj - pad, 0), w - 1)
                    m[t, si * w + sj, i * w + j] = 1.0
    return m


def _folded_gather(h, w, k):
    """AvgPool2d(2,2) on an (h,w) map folded into the next conv's im2col gather.

    Returns (h*w, k*k * (h/2*w/2)): all k*k folded tap matrices concatenated along
    the output axis, so the whole gather is ONE matmul in the kernel."""
    pool = _pool_matrix(h, w)                     # (h*w, h*w/4)
    taps = _tap_matrices(h // 2, w // 2, k)       # (k*k, h*w/4, h*w/4)
    return np.concatenate([pool @ taps[t] for t in range(k * k)], axis=1)


# ----------------------------------------------------------------------------
# The fused Pallas kernel (one grid step == one sample)
# ----------------------------------------------------------------------------
def _fused_mnistnet_kernel(patches_ref, w1_ref, r2f_ref, w2_ref, r3f_ref,
                           w3_ref, head_ref, out_ref, *, n_tap):
    dot = functools.partial(jnp.dot, preferred_element_type=jnp.float32)
    f32 = jnp.float32

    c1 = w1_ref.shape[0]
    c2 = w2_ref.shape[0]
    c3 = w3_ref.shape[0]
    pos2 = r2f_ref.shape[1] // n_tap              # H/2 * W/2
    pos3 = r3f_ref.shape[1] // n_tap              # H/4 * W/4

    patches = patches_ref[0]                      # (16, H*W): 9 taps + ones row + pad

    # ---- conv1 (3x3, replicate pad) + bias + ReLU: ONE matmul (bias via ones row)
    a1 = jnp.maximum(dot(w1_ref[...], patches), 0.0)          # (c1, H*W)

    # ---- pool1 + conv2 (5x5): ONE wide gather matmul (pool folded in), restack
    #      taps into sublanes, ONE stacked-K weight matmul (K = 25*c1 + 8, bias folded)
    g2w = dot(a1, r2f_ref[...])                               # (c1, 25*pos2)
    g2 = jnp.concatenate(
        [g2w[:, t * pos2:(t + 1) * pos2] for t in range(n_tap)]
        + [jnp.ones((8, pos2), f32)], axis=0)                 # (25*c1 + 8, pos2)
    a2 = jnp.maximum(dot(w2_ref[...], g2), 0.0)               # (c2, pos2)

    # ---- pool2 + conv3 (5x5): same structure (K = 25*c2 + 8)
    g3w = dot(a2, r3f_ref[...])                               # (c2, 25*pos3)
    g3 = jnp.concatenate(
        [g3w[:, t * pos3:(t + 1) * pos3] for t in range(n_tap)]
        + [jnp.ones((8, pos3), f32)], axis=0)                 # (25*c2 + 8, pos3)
    a3 = jnp.maximum(dot(w3_ref[...], g3), 0.0)               # (c3, pos3)

    # ---- pool3 output at (0,0) + Linear (bias folded): two tiny matmuls
    lin_cols = c3 + 8
    sel = head_ref[:, lin_cols:lin_cols + 8]                  # (pos3, 8); col 0 real
    feat = dot(a3, sel)                                       # (c3, 8);  col 0 real
    feat_e = jnp.concatenate([feat, jnp.ones((8, 8), f32)], axis=0)   # (c3+8, 8)
    out_ref[...] = dot(head_ref[:, :lin_cols], feat_e)[None]  # (1, 16, 8)


# ----------------------------------------------------------------------------
# Parameters (PyTorch-convention weights + kernel-ready fused constants)
# ----------------------------------------------------------------------------
def init_params(key, hidden_dim=8, hw=16):
    assert hw == 16, "head packing below assumes a 4x4 map before the final pool"
    c1, c2, c3 = hidden_dim, hidden_dim * 2, hidden_dim * 4
    keys = jax.random.split(key, 8)
    conv1_w = 0.1 * jax.random.normal(keys[0], (c1, 1, 3, 3), jnp.float32)
    conv1_b = 0.01 * jax.random.normal(keys[1], (c1,), jnp.float32)
    conv2_w = 0.05 * jax.random.normal(keys[2], (c2, c1, 5, 5), jnp.float32)
    conv2_b = 0.01 * jax.random.normal(keys[3], (c2,), jnp.float32)
    conv3_w = 0.05 * jax.random.normal(keys[4], (c3, c2, 5, 5), jnp.float32)
    conv3_b = 0.01 * jax.random.normal(keys[5], (c3,), jnp.float32)
    lin_w = 0.1 * jax.random.normal(keys[6], (10, c3), jnp.float32)
    lin_b = 0.01 * jax.random.normal(keys[7], (10,), jnp.float32)

    c1w, c1b = np.asarray(conv1_w), np.asarray(conv1_b)
    c2w, c2b = np.asarray(conv2_w), np.asarray(conv2_b)
    c3w, c3b = np.asarray(conv3_w), np.asarray(conv3_b)
    lw, lb = np.asarray(lin_w), np.asarray(lin_b)

    # conv1: 9 taps + bias column (matched by the ones row of `patches`), K padded to 16
    w1e = np.zeros((c1, 16), np.float32)
    w1e[:, :9] = c1w.reshape(c1, 9)
    w1e[:, 9] = c1b

    # conv2 / conv3 tap weights concatenated along K, bias in the first ones-row column
    w2e = np.zeros((c2, 25 * c1 + 8), np.float32)
    w2e[:, :25 * c1] = c2w.transpose(0, 2, 3, 1).reshape(c2, 25 * c1)
    w2e[:, 25 * c1] = c2b

    w3e = np.zeros((c3, 25 * c2 + 8), np.float32)
    w3e[:, :25 * c2] = c3w.transpose(0, 2, 3, 1).reshape(c3, 25 * c2)
    w3e[:, 25 * c2] = c3b

    # gathers with the preceding AvgPool folded in (shared across batch)
    r2f = _folded_gather(hw, hw, 5)                 # (256, 25*64)
    r3f = _folded_gather(hw // 2, hw // 2, 5)       # (64, 25*16)

    # head (16, c3+16): [ lin_w (10 rows, padded to 16) | lin_b/8 x8 | pool-(0,0) sel ]
    w3s = hw // 4
    head = np.zeros((16, c3 + 16), np.float32)
    head[:10, :c3] = lw
    head[:10, c3:c3 + 8] = lb[:, None] / 8.0        # summed against 8 ones rows
    for (i, j) in ((0, 0), (0, 1), (1, 0), (1, 1)):
        head[i * w3s + j, c3 + 8] = 0.25            # AvgPool output at (0,0)

    return {
        # kernel-ready tensors -------------------------------------------------
        "w1e": jnp.asarray(w1e), "r2f": jnp.asarray(r2f), "w2e": jnp.asarray(w2e),
        "r3f": jnp.asarray(r3f), "w3e": jnp.asarray(w3e), "head": jnp.asarray(head),
        # raw PyTorch-convention weights (for the pure-JAX reference) -----------
        "conv1_w": conv1_w, "conv1_b": conv1_b,
        "conv2_w": conv2_w, "conv2_b": conv2_b,
        "conv3_w": conv3_w, "conv3_b": conv3_b,
        "lin_w": lin_w, "lin_b": lin_b,
    }


# ----------------------------------------------------------------------------
# Forward pass (MnistNet.forward)
# ----------------------------------------------------------------------------
def _im2col_conv1(x_nchw):
    """3x3 replicate-padded im2col -> (B, 16, H*W): rows 0-8 taps, row 9 ones (bias),
    rows 10-15 zero padding.  Tiny wrapper-side glue (the input must come from HBM
    anyway)."""
    B, _, H, W = x_nchw.shape
    xp = jnp.pad(x_nchw[:, 0], ((0, 0), (1, 1), (1, 1)), mode="edge")
    views = [xp[:, di:di + H, dj:dj + W].reshape(B, H * W)
             for di in range(3) for dj in range(3)]
    taps = jnp.stack(views, axis=1)                            # (B, 9, H*W)
    ones = jnp.ones((B, 1, H * W), x_nchw.dtype)
    zeros = jnp.zeros((B, 6, H * W), x_nchw.dtype)
    return jnp.concatenate([taps, ones, zeros], axis=1)        # (B, 16, H*W)


@jax.jit
def mnist_net_forward(x_nchw, params):
    B, _, H, W = x_nchw.shape
    patches = _im2col_conv1(x_nchw)

    w1e, r2f, w2e = params["w1e"], params["r2f"], params["w2e"]
    r3f, w3e, head = params["r3f"], params["w3e"], params["head"]

    const_spec = lambda shape: pl.BlockSpec(shape, lambda b: (0,) * len(shape))

    out = pl.pallas_call(
        functools.partial(_fused_mnistnet_kernel, n_tap=25),
        out_shape=jax.ShapeDtypeStruct((B, 16, 8), jnp.float32),
        grid=(B,),
        in_specs=[
            pl.BlockSpec((1, 16, H * W), lambda b: (b, 0, 0)),   # per-sample patches
            const_spec(w1e.shape),                               # shared weights /
            const_spec(r2f.shape),                               # constants stay
            const_spec(w2e.shape),                               # VMEM-resident
            const_spec(r3f.shape),                               # across grid steps
            const_spec(w3e.shape),
            const_spec(head.shape),
        ],
        out_specs=pl.BlockSpec((1, 16, 8), lambda b: (b, 0, 0)),
        compiler_params=pltpu.CompilerParams(
            dimension_semantics=("parallel",)),                  # v7x: 2 TCs share batch
    )(patches, w1e, r2f, w2e, r3f, w3e, head)

    return out[:, :10, 0]                                        # (B, 10)


# ----------------------------------------------------------------------------
# Pure-JAX reference (correctness check)
# ----------------------------------------------------------------------------
def _ref_conv_replicate(x_nchw, w_oihw, b, pad):
    xp = jnp.pad(x_nchw, ((0, 0), (0, 0), (pad, pad), (pad, pad)), mode="edge")
    y = jax.lax.conv_general_dilated(
        xp, w_oihw, window_strides=(1, 1), padding="VALID",
        dimension_numbers=("NCHW", "OIHW", "NCHW"))
    return y + b[None, :, None, None]


def _ref_pool(x_nchw):
    B, C, H, W = x_nchw.shape
    return x_nchw.reshape(B, C, H // 2, 2, W // 2, 2).mean(axis=(3, 5))


def mnist_net_reference(x_nchw, p):
    x = jax.nn.relu(_ref_conv_replicate(x_nchw, p["conv1_w"], p["conv1_b"], 1))
    x = _ref_pool(x)
    x = jax.nn.relu(_ref_conv_replicate(x, p["conv2_w"], p["conv2_b"], 2))
    x = _ref_pool(x)
    x = jax.nn.relu(_ref_conv_replicate(x, p["conv3_w"], p["conv3_b"], 2))
    x = _ref_pool(x)
    feat = x[:, :, 0, 0]
    return feat @ p["lin_w"].T + p["lin_b"]


# ----------------------------------------------------------------------------
if __name__ == "__main__":
    key = jax.random.PRNGKey(0)
    k_x, k_p = jax.random.split(key)

    B, H, W = 2, 16, 16                       # small MNIST-like input, 1 channel
    x = jax.random.normal(k_x, (B, 1, H, W), jnp.float32)
    params = init_params(k_p, hidden_dim=8, hw=H)

    out = jax.block_until_ready(mnist_net_forward(x, params))
    assert out.shape == (B, 10) and out.dtype == jnp.float32

    ref = jax.block_until_ready(mnist_net_reference(x, params))
    assert jnp.allclose(out, ref, atol=1e-3, rtol=1e-3), "mismatch vs JAX reference"

    print("KERNEL_OK")
</pallas_src>

<mosaic_0001>
module attributes {stable_mosaic.version = 11 : i64} {
  func.func @_fused_mnistnet_kernel(%arg0: i32, %arg1: memref<1x16x256xf32, #tpu.memory_space<vmem>>, %arg2: memref<8x16xf32, #tpu.memory_space<vmem>>, %arg3: memref<256x1600xf32, #tpu.memory_space<vmem>>, %arg4: memref<16x208xf32, #tpu.memory_space<vmem>>, %arg5: memref<64x400xf32, #tpu.memory_space<vmem>>, %arg6: memref<32x408xf32, #tpu.memory_space<vmem>>, %arg7: memref<16x48xf32, #tpu.memory_space<vmem>>, %arg8: memref<1x16x8xf32, #tpu.memory_space<vmem>>) attributes {dimension_semantics = [#tpu.dimension_semantics<parallel>], iteration_bounds = array<i64: 2>, scalar_prefetch = 0 : i64, scratch_operands = 0 : i64, tpu.core_type = #tpu.core_type<tc>, window_params = [{transform_indices = @transform_0, window_bounds = array<i64: 1, 16, 256>}, {pipeline_mode = #tpu.pipeline_mode<synchronous>, transform_indices = @transform_1, window_bounds = array<i64: 8, 16>}, {pipeline_mode = #tpu.pipeline_mode<synchronous>, transform_indices = @transform_2, window_bounds = array<i64: 256, 1600>}, {pipeline_mode = #tpu.pipeline_mode<synchronous>, transform_indices = @transform_3, window_bounds = array<i64: 16, 208>}, {pipeline_mode = #tpu.pipeline_mode<synchronous>, transform_indices = @transform_4, window_bounds = array<i64: 64, 400>}, {pipeline_mode = #tpu.pipeline_mode<synchronous>, transform_indices = @transform_5, window_bounds = array<i64: 32, 408>}, {pipeline_mode = #tpu.pipeline_mode<synchronous>, transform_indices = @transform_6, window_bounds = array<i64: 16, 48>}, {transform_indices = @transform_7, window_bounds = array<i64: 1, 16, 8>}]} {
    %c0 = arith.constant 0 : index
    %c0_0 = arith.constant 0 : index
    %c0_1 = arith.constant 0 : index
    %0 = vector.load %arg1[%c0, %c0_0, %c0_1] : memref<1x16x256xf32, #tpu.memory_space<vmem>>, vector<1x16x256xf32>
    %1 = vector.shape_cast %0 : vector<1x16x256xf32> to vector<16x256xf32>
    %c0_2 = arith.constant 0 : index
    %c0_3 = arith.constant 0 : index
    %2 = vector.load %arg2[%c0_2, %c0_3] : memref<8x16xf32, #tpu.memory_space<vmem>>, vector<8x16xf32>
    %cst = arith.constant dense<0.000000e+00> : vector<8x256xf32>
    %3 = tpu.matmul %2, %1, %cst {dimension_numbers = #tpu.dot_dimension_numbers<[1], [0], [0], [1], [0, 0, 1, 1], [], []>} : vector<8x16xf32>, vector<16x256xf32>, vector<8x256xf32> -> vector<8x256xf32>
    %cst_4 = arith.constant 0.000000e+00 : f32
    %4 = vector.broadcast %cst_4 : f32 to vector<8x256xf32>
    %5 = arith.maximumf %3, %4 : vector<8x256xf32>
    %c0_5 = arith.constant 0 : index
    %c0_6 = arith.constant 0 : index
    %6 = vector.load %arg3[%c0_5, %c0_6] : memref<256x1600xf32, #tpu.memory_space<vmem>>, vector<256x1600xf32>
    %cst_7 = arith.constant dense<0.000000e+00> : vector<8x1600xf32>
    %7 = tpu.matmul %5, %6, %cst_7 {dimension_numbers = #tpu.dot_dimension_numbers<[1], [0], [0], [1], [0, 0, 1, 1], [], []>} : vector<8x256xf32>, vector<256x1600xf32>, vector<8x1600xf32> -> vector<8x1600xf32>
    %8 = vector.extract_strided_slice %7 {offsets = [0, 0], sizes = [8, 64], strides = [1, 1]} : vector<8x1600xf32> to vector<8x64xf32>
    %9 = vector.extract_strided_slice %7 {offsets = [0, 64], sizes = [8, 64], strides = [1, 1]} : vector<8x1600xf32> to vector<8x64xf32>
    %10 = vector.extract_strided_slice %7 {offsets = [0, 128], sizes = [8, 64], strides = [1, 1]} : vector<8x1600xf32> to vector<8x64xf32>
    %11 = vector.extract_strided_slice %7 {offsets = [0, 192], sizes = [8, 64], strides = [1, 1]} : vector<8x1600xf32> to vector<8x64xf32>
    %12 = vector.extract_strided_slice %7 {offsets = [0, 256], sizes = [8, 64], strides = [1, 1]} : vector<8x1600xf32> to vector<8x64xf32>
    %13 = vector.extract_strided_slice %7 {offsets = [0, 320], sizes = [8, 64], strides = [1, 1]} : vector<8x1600xf32> to vector<8x64xf32>
    %14 = vector.extract_strided_slice %7 {offsets = [0, 384], sizes = [8, 64], strides = [1, 1]} : vector<8x1600xf32> to vector<8x64xf32>
    %15 = vector.extract_strided_slice %7 {offsets = [0, 448], sizes = [8, 64], strides = [1, 1]} : vector<8x1600xf32> to vector<8x64xf32>
    %16 = vector.extract_strided_slice %7 {offsets = [0, 512], sizes = [8, 64], strides = [1, 1]} : vector<8x1600xf32> to vector<8x64xf32>
    %17 = vector.extract_strided_slice %7 {offsets = [0, 576], sizes = [8, 64], strides = [1, 1]} : vector<8x1600xf32> to vector<8x64xf32>
    %18 = vector.extract_strided_slice %7 {offsets = [0, 640], sizes = [8, 64], strides = [1, 1]} : vector<8x1600xf32> to vector<8x64xf32>
    %19 = vector.extract_strided_slice %7 {offsets = [0, 704], sizes = [8, 64], strides = [1, 1]} : vector<8x1600xf32> to vector<8x64xf32>
    %20 = vector.extract_strided_slice %7 {offsets = [0, 768], sizes = [8, 64], strides = [1, 1]} : vector<8x1600xf32> to vector<8x64xf32>
    %21 = vector.extract_strided_slice %7 {offsets = [0, 832], sizes = [8, 64], strides = [1, 1]} : vector<8x1600xf32> to vector<8x64xf32>
    %22 = vector.extract_strided_slice %7 {offsets = [0, 896], sizes = [8, 64], strides = [1, 1]} : vector<8x1600xf32> to vector<8x64xf32>
    %23 = vector.extract_strided_slice %7 {offsets = [0, 960], sizes = [8, 64], strides = [1, 1]} : vector<8x1600xf32> to vector<8x64xf32>
    %24 = vector.extract_strided_slice %7 {offsets = [0, 1024], sizes = [8, 64], strides = [1, 1]} : vector<8x1600xf32> to vector<8x64xf32>
    %25 = vector.extract_strided_slice %7 {offsets = [0, 1088], sizes = [8, 64], strides = [1, 1]} : vector<8x1600xf32> to vector<8x64xf32>
    %26 = vector.extract_strided_slice %7 {offsets = [0, 1152], sizes = [8, 64], strides = [1, 1]} : vector<8x1600xf32> to vector<8x64xf32>
    %27 = vector.extract_strided_slice %7 {offsets = [0, 1216], sizes = [8, 64], strides = [1, 1]} : vector<8x1600xf32> to vector<8x64xf32>
    %28 = vector.extract_strided_slice %7 {offsets = [0, 1280], sizes = [8, 64], strides = [1, 1]} : vector<8x1600xf32> to vector<8x64xf32>
    %29 = vector.extract_strided_slice %7 {offsets = [0, 1344], sizes = [8, 64], strides = [1, 1]} : vector<8x1600xf32> to vector<8x64xf32>
    %30 = vector.extract_strided_slice %7 {offsets = [0, 1408], sizes = [8, 64], strides = [1, 1]} : vector<8x1600xf32> to vector<8x64xf32>
    %31 = vector.extract_strided_slice %7 {offsets = [0, 1472], sizes = [8, 64], strides = [1, 1]} : vector<8x1600xf32> to vector<8x64xf32>
    %32 = vector.extract_strided_slice %7 {offsets = [0, 1536], sizes = [8, 64], strides = [1, 1]} : vector<8x1600xf32> to vector<8x64xf32>
    %cst_8 = arith.constant 1.000000e+00 : f32
    %33 = vector.broadcast %cst_8 : f32 to vector<8x64xf32>
    %34 = tpu.concatenate %8, %9, %10, %11, %12, %13, %14, %15, %16, %17, %18, %19, %20, %21, %22, %23 in 0 : vector<8x64xf32>, vector<8x64xf32>, vector<8x64xf32>, vector<8x64xf32>, vector<8x64xf32>, vector<8x64xf32>, vector<8x64xf32>, vector<8x64xf32>, vector<8x64xf32>, vector<8x64xf32>, vector<8x64xf32>, vector<8x64xf32>, vector<8x64xf32>, vector<8x64xf32>, vector<8x64xf32>, vector<8x64xf32> -> vector<128x64xf32>
    %35 = tpu.concatenate %24, %25, %26, %27, %28, %29, %30, %31, %32, %33 in 0 : vector<8x64xf32>, vector<8x64xf32>, vector<8x64xf32>, vector<8x64xf32>, vector<8x64xf32>, vector<8x64xf32>, vector<8x64xf32>, vector<8x64xf32>, vector<8x64xf32>, vector<8x64xf32> -> vector<80x64xf32>
    %36 = tpu.concatenate %34, %35 in 0 : vector<128x64xf32>, vector<80x64xf32> -> vector<208x64xf32>
    %c0_9 = arith.constant 0 : index
    %c0_10 = arith.constant 0 : index
    %37 = vector.load %arg4[%c0_9, %c0_10] : memref<16x208xf32, #tpu.memory_space<vmem>>, vector<16x208xf32>
    %cst_11 = arith.constant dense<0.000000e+00> : vector<16x64xf32>
    %38 = tpu.matmul %37, %36, %cst_11 {dimension_numbers = #tpu.dot_dimension_numbers<[1], [0], [0], [1], [0, 0, 1, 1], [], []>} : vector<16x208xf32>, vector<208x64xf32>, vector<16x64xf32> -> vector<16x64xf32>
    %cst_12 = arith.constant 0.000000e+00 : f32
    %39 = vector.broadcast %cst_12 : f32 to vector<16x64xf32>
    %40 = arith.maximumf %38, %39 : vector<16x64xf32>
    %c0_13 = arith.constant 0 : index
    %c0_14 = arith.constant 0 : index
    %41 = vector.load %arg5[%c0_13, %c0_14] : memref<64x400xf32, #tpu.memory_space<vmem>>, vector<64x400xf32>
    %cst_15 = arith.constant dense<0.000000e+00> : vector<16x400xf32>
    %42 = tpu.matmul %40, %41, %cst_15 {dimension_numbers = #tpu.dot_dimension_numbers<[1], [0], [0], [1], [0, 0, 1, 1], [], []>} : vector<16x64xf32>, vector<64x400xf32>, vector<16x400xf32> -> vector<16x400xf32>
    %43 = vector.extract_strided_slice %42 {offsets = [0, 0], sizes = [16, 16], strides = [1, 1]} : vector<16x400xf32> to vector<16x16xf32>
    %44 = vector.extract_strided_slice %42 {offsets = [0, 16], sizes = [16, 16], strides = [1, 1]} : vector<16x400xf32> to vector<16x16xf32>
    %45 = vector.extract_strided_slice %42 {offsets = [0, 32], sizes = [16, 16], strides = [1, 1]} : vector<16x400xf32> to vector<16x16xf32>
    %46 = vector.extract_strided_slice %42 {offsets = [0, 48], sizes = [16, 16], strides = [1, 1]} : vector<16x400xf32> to vector<16x16xf32>
    %47 = vector.extract_strided_slice %42 {offsets = [0, 64], sizes = [16, 16], strides = [1, 1]} : vector<16x400xf32> to vector<16x16xf32>
    %48 = vector.extract_strided_slice %42 {offsets = [0, 80], sizes = [16, 16], strides = [1, 1]} : vector<16x400xf32> to vector<16x16xf32>
    %49 = vector.extract_strided_slice %42 {offsets = [0, 96], sizes = [16, 16], strides = [1, 1]} : vector<16x400xf32> to vector<16x16xf32>
    %50 = vector.extract_strided_slice %42 {offsets = [0, 112], sizes = [16, 16], strides = [1, 1]} : vector<16x400xf32> to vector<16x16xf32>
    %51 = vector.extract_strided_slice %42 {offsets = [0, 128], sizes = [16, 16], strides = [1, 1]} : vector<16x400xf32> to vector<16x16xf32>
    %52 = vector.extract_strided_slice %42 {offsets = [0, 144], sizes = [16, 16], strides = [1, 1]} : vector<16x400xf32> to vector<16x16xf32>
    %53 = vector.extract_strided_slice %42 {offsets = [0, 160], sizes = [16, 16], strides = [1, 1]} : vector<16x400xf32> to vector<16x16xf32>
    %54 = vector.extract_strided_slice %42 {offsets = [0, 176], sizes = [16, 16], strides = [1, 1]} : vector<16x400xf32> to vector<16x16xf32>
    %55 = vector.extract_strided_slice %42 {offsets = [0, 192], sizes = [16, 16], strides = [1, 1]} : vector<16x400xf32> to vector<16x16xf32>
    %56 = vector.extract_strided_slice %42 {offsets = [0, 208], sizes = [16, 16], strides = [1, 1]} : vector<16x400xf32> to vector<16x16xf32>
    %57 = vector.extract_strided_slice %42 {offsets = [0, 224], sizes = [16, 16], strides = [1, 1]} : vector<16x400xf32> to vector<16x16xf32>
    %58 = vector.extract_strided_slice %42 {offsets = [0, 240], sizes = [16, 16], strides = [1, 1]} : vector<16x400xf32> to vector<16x16xf32>
    %59 = vector.extract_strided_slice %42 {offsets = [0, 256], sizes = [16, 16], strides = [1, 1]} : vector<16x400xf32> to vector<16x16xf32>
    %60 = vector.extract_strided_slice %42 {offsets = [0, 272], sizes = [16, 16], strides = [1, 1]} : vector<16x400xf32> to vector<16x16xf32>
    %61 = vector.extract_strided_slice %42 {offsets = [0, 288], sizes = [16, 16], strides = [1, 1]} : vector<16x400xf32> to vector<16x16xf32>
    %62 = vector.extract_strided_slice %42 {offsets = [0, 304], sizes = [16, 16], strides = [1, 1]} : vector<16x400xf32> to vector<16x16xf32>
    %63 = vector.extract_strided_slice %42 {offsets = [0, 320], sizes = [16, 16], strides = [1, 1]} : vector<16x400xf32> to vector<16x16xf32>
    %64 = vector.extract_strided_slice %42 {offsets = [0, 336], sizes = [16, 16], strides = [1, 1]} : vector<16x400xf32> to vector<16x16xf32>
    %65 = vector.extract_strided_slice %42 {offsets = [0, 352], sizes = [16, 16], strides = [1, 1]} : vector<16x400xf32> to vector<16x16xf32>
    %66 = vector.extract_strided_slice %42 {offsets = [0, 368], sizes = [16, 16], strides = [1, 1]} : vector<16x400xf32> to vector<16x16xf32>
    %67 = vector.extract_strided_slice %42 {offsets = [0, 384], sizes = [16, 16], strides = [1, 1]} : vector<16x400xf32> to vector<16x16xf32>
    %cst_16 = arith.constant 1.000000e+00 : f32
    %68 = vector.broadcast %cst_16 : f32 to vector<8x16xf32>
    %69 = tpu.concatenate %43, %44, %45, %46, %47, %48, %49, %50, %51, %52, %53, %54, %55, %56, %57, %58 in 0 : vector<16x16xf32>, vector<16x16xf32>, vector<16x16xf32>, vector<16x16xf32>, vector<16x16xf32>, vector<16x16xf32>, vector<16x16xf32>, vector<16x16xf32>, vector<16x16xf32>, vector<16x16xf32>, vector<16x16xf32>, vector<16x16xf32>, vector<16x16xf32>, vector<16x16xf32>, vector<16x16xf32>, vector<16x16xf32> -> vector<256x16xf32>
    %70 = tpu.concatenate %59, %60, %61, %62, %63, %64, %65, %66, %67, %68 in 0 : vector<16x16xf32>, vector<16x16xf32>, vector<16x16xf32>, vector<16x16xf32>, vector<16x16xf32>, vector<16x16xf32>, vector<16x16xf32>, vector<16x16xf32>, vector<16x16xf32>, vector<8x16xf32> -> vector<152x16xf32>
    %71 = tpu.concatenate %69, %70 in 0 : vector<256x16xf32>, vector<152x16xf32> -> vector<408x16xf32>
    %c0_17 = arith.constant 0 : index
    %c0_18 = arith.constant 0 : index
    %72 = vector.load %arg6[%c0_17, %c0_18] : memref<32x408xf32, #tpu.memory_space<vmem>>, vector<32x408xf32>
    %cst_19 = arith.constant dense<0.000000e+00> : vector<32x16xf32>
    %73 = tpu.matmul %72, %71, %cst_19 {dimension_numbers = #tpu.dot_dimension_numbers<[1], [0], [0], [1], [0, 0, 1, 1], [], []>} : vector<32x408xf32>, vector<408x16xf32>, vector<32x16xf32> -> vector<32x16xf32>
    %cst_20 = arith.constant 0.000000e+00 : f32
    %74 = vector.broadcast %cst_20 : f32 to vector<32x16xf32>
    %75 = arith.maximumf %73, %74 : vector<32x16xf32>
    %c0_21 = arith.constant 0 : index
    %c40 = arith.constant 40 : index
    %76 = vector.load %arg7[%c0_21, %c40] : memref<16x48xf32, #tpu.memory_space<vmem>>, vector<16x8xf32>
    %cst_22 = arith.constant dense<0.000000e+00> : vector<32x8xf32>
    %77 = tpu.matmul %75, %76, %cst_22 {dimension_numbers = #tpu.dot_dimension_numbers<[1], [0], [0], [1], [0, 0, 1, 1], [], []>} : vector<32x16xf32>, vector<16x8xf32>, vector<32x8xf32> -> vector<32x8xf32>
    %cst_23 = arith.constant 1.000000e+00 : f32
    %78 = vector.broadcast %cst_23 : f32 to vector<8x8xf32>
    %79 = tpu.concatenate %77, %78 in 0 : vector<32x8xf32>, vector<8x8xf32> -> vector<40x8xf32>
    %c0_24 = arith.constant 0 : index
    %c0_25 = arith.constant 0 : index
    %80 = vector.load %arg7[%c0_24, %c0_25] : memref<16x48xf32, #tpu.memory_space<vmem>>, vector<16x40xf32>
    %cst_26 = arith.constant dense<0.000000e+00> : vector<16x8xf32>
    %81 = tpu.matmul %80, %79, %cst_26 {dimension_numbers = #tpu.dot_dimension_numbers<[1], [0], [0], [1], [0, 0, 1, 1], [], []>} : vector<16x40xf32>, vector<40x8xf32>, vector<16x8xf32> -> vector<16x8xf32>
    %82 = vector.shape_cast %81 : vector<16x8xf32> to vector<1x16x8xf32>
    %c0_27 = arith.constant 0 : index
    %c0_28 = arith.constant 0 : index
    %c0_29 = arith.constant 0 : index
    %83 = vector.load %arg8[%c0_27, %c0_28, %c0_29] : memref<1x16x8xf32, #tpu.memory_space<vmem>>, vector<1x16x8xf32>
    tpu.vector_store %arg8[%c0_27, %c0_28, %c0_29], %82 {strides = array<i32>} : memref<1x16x8xf32, #tpu.memory_space<vmem>>, vector<1x16x8xf32>,
    return
  }
  func.func @transform_0(%arg0: i32) -> (i32, i32, i32) {
    %c0_i32 = arith.constant 0 : i32
    %c0_i32_0 = arith.constant 0 : i32
    %c0_i32_1 = arith.constant 0 : i32
    return %arg0, %c0_i32, %c0_i32_0 : i32, i32, i32
  }
  func.func @transform_1(%arg0: i32) -> (i32, i32) {
    %c0_i32 = arith.constant 0 : i32
    %c0_i32_0 = arith.constant 0 : i32
    %c0_i32_1 = arith.constant 0 : i32
    return %c0_i32, %c0_i32_0 : i32, i32
  }
  func.func @transform_2(%arg0: i32) -> (i32, i32) {
    %c0_i32 = arith.constant 0 : i32
    %c0_i32_0 = arith.constant 0 : i32
    %c0_i32_1 = arith.constant 0 : i32
    return %c0_i32, %c0_i32_0 : i32, i32
  }
  func.func @transform_3(%arg0: i32) -> (i32, i32) {
    %c0_i32 = arith.constant 0 : i32
    %c0_i32_0 = arith.constant 0 : i32
    %c0_i32_1 = arith.constant 0 : i32
    return %c0_i32, %c0_i32_0 : i32, i32
  }
  func.func @transform_4(%arg0: i32) -> (i32, i32) {
    %c0_i32 = arith.constant 0 : i32
    %c0_i32_0 = arith.constant 0 : i32
    %c0_i32_1 = arith.constant 0 : i32
    return %c0_i32, %c0_i32_0 : i32, i32
  }
  func.func @transform_5(%arg0: i32) -> (i32, i32) {
    %c0_i32 = arith.constant 0 : i32
    %c0_i32_0 = arith.constant 0 : i32
    %c0_i32_1 = arith.constant 0 : i32
    return %c0_i32, %c0_i32_0 : i32, i32
  }
  func.func @transform_6(%arg0: i32) -> (i32, i32) {
    %c0_i32 = arith.constant 0 : i32
    %c0_i32_0 = arith.constant 0 : i32
    %c0_i32_1 = arith.constant 0 : i32
    return %c0_i32, %c0_i32_0 : i32, i32
  }
  func.func @transform_7(%arg0: i32) -> (i32, i32, i32) {
    %c0_i32 = arith.constant 0 : i32
    %c0_i32_0 = arith.constant 0 : i32
    %c0_i32_1 = arith.constant 0 : i32
    return %arg0, %c0_i32, %c0_i32_0 : i32, i32, i32
  }
}

</mosaic_0001>

<llo_original>
// kernel: mnist_net_forward.1
$region0: #{mnist_net_forward.1}
  #allocation0 [shape = 'u32[]', space=smem, size = 0x4, offset = 0x4, fixed_abs, tag = 'smem constant byte address 0x4 - core index']
  #allocation1 [shape = 'u32[72,128]{1,0:T(1,128)}', space=vmem, size = 0x9000, scoped, tag = 'internal scratch']
  %s0 = inlined_call_operand.vmem [shape: f32[2,16,256], index: 0, kind: input, shape index: {}]
  %s1 = inlined_call_operand.vmem [shape: f32[8,16], index: 1, kind: input, shape index: {}]
  %s2 = inlined_call_operand.vmem [shape: f32[256,1600], index: 2, kind: input, shape index: {}]
  %s3 = inlined_call_operand.vmem [shape: f32[16,208], index: 3, kind: input, shape index: {}]
  %s4 = inlined_call_operand.vmem [shape: f32[64,400], index: 4, kind: input, shape index: {}]
  %s5 = inlined_call_operand.vmem [shape: f32[32,408], index: 5, kind: input, shape index: {}]
  %s6 = inlined_call_operand.vmem [shape: f32[16,48], index: 6, kind: input, shape index: {}]
  %s7 = inlined_call_operand.vmem [shape: f32[2,16,8], index: 7, kind: output, shape index: {}]
  %s8 = sld [smem:[#allocation0]]
  $region61: #{mnist_net_forward.1} parent=0
    _
  %s10 = ssub.s32 1, %s8
  %s11 = scalar_select 0, %s10, %s8
  loop: start=0, step=1, limit=4
  $region2: #{mnist_net_forward.1} parent=0 // loop_pre_header
    _
  $region3: #{mnist_net_forward.1} parent=0 // loop_header
    %s13 = sphi 0, %s17
    %p14 = scmp.ge.s32.totalorder %s13, 4
    %s23 = sphi 0, %s25
    %s26 = sphi 0, %s23
    %s27 = sphi 0, %s26
    %s43 = sphi 0, %s27
    %s47 = sphi 0, %s47
    %s49 = sphi 0, %s47
    %s50 = sphi 0, %s49
    %s64 = sphi 0, %s50
    %s68 = sphi 0, %s68
    %s70 = sphi 0, %s68
    %s71 = sphi 0, %s70
    %s85 = sphi 0, %s71
    %s89 = sphi 0, %s89
    %s91 = sphi 0, %s89
    %s92 = sphi 0, %s91
    %s106 = sphi 0, %s92
    %s110 = sphi 0, %s110
    %s112 = sphi 0, %s110
    %s113 = sphi 0, %s112
    %s127 = sphi 0, %s113
    %s131 = sphi 0, %s131
    %s133 = sphi 0, %s131
    %s134 = sphi 0, %s133
    %s148 = sphi 0, %s134
    %s152 = sphi 0, %s152
    %s154 = sphi 0, %s152
    %s155 = sphi 0, %s154
    %s169 = sphi 0, %s155
    %s175 = sphi 0, %s177
    %s178 = sphi 0, %s175
    %s179 = sphi 0, %s178
    %s195 = sphi 0, %s179
  $region4: #{mnist_net_forward.1} parent=0 // loop_header_branch
    %16 = sbr.rel (%p14) target = $region8
  $region5: #{mnist_net_forward.1} parent=0 // loop_body
    %s18 = ssub.s32 %s13, 1
    %s19 = ssub.s32 %s13, 2
    %s20 = sadd.s32 %s13, 1
    %s21 = ssub.s32 %s13, %s20
    %p22 = scmp.eq.s32.totalorder %s21, 0
    %s24 = sadd.s32 %s23, 1
    %s25 = scalar_select %p22, %s23, %s24
    %p28 = pneg %p22
    %p29 = scmp.eq.s32.totalorder %s13, 1
    %p30 = por %p28, %p29
    %p31 = scmp.ne.s32.totalorder %s23, %s26
    %p32 = scmp.eq.s32.totalorder %s13, 0
    %p33 = por %p31, %p32
    %p34 = scmp.ne.s32.totalorder %s23, %s26
    %p35 = scmp.eq.s32.totalorder %s18, 1
    %p36 = por %p34, %p35
    %p37 = scmp.ne.s32.totalorder %s26, %s27
    %p38 = scmp.eq.s32.totalorder %s18, 0
    %p39 = por %p37, %p38
    %p40 = scmp.ne.s32.totalorder %s26, %s27
    %p41 = scmp.eq.s32.totalorder %s19, 1
    %p42 = por %p40, %p41
    %p44 = scmp.ne.s32.totalorder %s27, %s43
    %p45 = scmp.eq.s32.totalorder %s19, 0
    %p46 = por %p44, %p45
    %s48 = sadd.s32 %s47, 1
    %p51 = scmp.eq.s32.totalorder %s13, 1
    %p52 = scmp.ne.s32.totalorder %s47, %s49
    %p53 = scmp.eq.s32.totalorder %s13, 0
    %p54 = por %p52, %p53
    %p55 = scmp.ne.s32.totalorder %s47, %s49
    %p56 = scmp.eq.s32.totalorder %s18, 1
    %p57 = por %p55, %p56
    %p58 = scmp.ne.s32.totalorder %s49, %s50
    %p59 = scmp.eq.s32.totalorder %s18, 0
    %p60 = por %p58, %p59
    %p61 = scmp.ne.s32.totalorder %s49, %s50
    %p62 = scmp.eq.s32.totalorder %s19, 1
    %p63 = por %p61, %p62
    %p65 = scmp.ne.s32.totalorder %s50, %s64
    %p66 = scmp.eq.s32.totalorder %s19, 0
    %p67 = por %p65, %p66
    %s69 = sadd.s32 %s68, 1
    %p72 = scmp.eq.s32.totalorder %s13, 1
    %p73 = scmp.ne.s32.totalorder %s68, %s70
    %p74 = scmp.eq.s32.totalorder %s13, 0
    %p75 = por %p73, %p74
    %p76 = scmp.ne.s32.totalorder %s68, %s70
    %p77 = scmp.eq.s32.totalorder %s18, 1
    %p78 = por %p76, %p77
    %p79 = scmp.ne.s32.totalorder %s70, %s71
    %p80 = scmp.eq.s32.totalorder %s18, 0
    %p81 = por %p79, %p80
    %p82 = scmp.ne.s32.totalorder %s70, %s71
    %p83 = scmp.eq.s32.totalorder %s19, 1
    %p84 = por %p82, %p83
    %p86 = scmp.ne.s32.totalorder %s71, %s85
    %p87 = scmp.eq.s32.totalorder %s19, 0
    %p88 = por %p86, %p87
    %s90 = sadd.s32 %s89, 1
    %p93 = scmp.eq.s32.totalorder %s13, 1
    %p94 = scmp.ne.s32.totalorder %s89, %s91
    %p95 = scmp.eq.s32.totalorder %s13, 0
    %p96 = por %p94, %p95
    %p97 = scmp.ne.s32.totalorder %s89, %s91
    %p98 = scmp.eq.s32.totalorder %s18, 1
    %p99 = por %p97, %p98
    %p100 = scmp.ne.s32.totalorder %s91, %s92
    %p101 = scmp.eq.s32.totalorder %s18, 0
    %p102 = por %p100, %p101
    %p103 = scmp.ne.s32.totalorder %s91, %s92
    %p104 = scmp.eq.s32.totalorder %s19, 1
    %p105 = por %p103, %p104
    %p107 = scmp.ne.s32.totalorder %s92, %s106
    %p108 = scmp.eq.s32.totalorder %s19, 0
    %p109 = por %p107, %p108
    %s111 = sadd.s32 %s110, 1
    %p114 = scmp.eq.s32.totalorder %s13, 1
    %p115 = scmp.ne.s32.totalorder %s110, %s112
    %p116 = scmp.eq.s32.totalorder %s13, 0
    %p117 = por %p115, %p116
    %p118 = scmp.ne.s32.totalorder %s110, %s112
    %p119 = scmp.eq.s32.totalorder %s18, 1
    %p120 = por %p118, %p119
    %p121 = scmp.ne.s32.totalorder %s112, %s113
    %p122 = scmp.eq.s32.totalorder %s18, 0
    %p123 = por %p121, %p122
    %p124 = scmp.ne.s32.totalorder %s112, %s113
    %p125 = scmp.eq.s32.totalorder %s19, 1
    %p126 = por %p124, %p125
    %p128 = scmp.ne.s32.totalorder %s113, %s127
    %p129 = scmp.eq.s32.totalorder %s19, 0
    %p130 = por %p128, %p129
    %s132 = sadd.s32 %s131, 1
    %p135 = scmp.eq.s32.totalorder %s13, 1
    %p136 = scmp.ne.s32.totalorder %s131, %s133
    %p137 = scmp.eq.s32.totalorder %s13, 0
    %p138 = por %p136, %p137
    %p139 = scmp.ne.s32.totalorder %s131, %s133
    %p140 = scmp.eq.s32.totalorder %s18, 1
    %p141 = por %p139, %p140
    %p142 = scmp.ne.s32.totalorder %s133, %s134
    %p143 = scmp.eq.s32.totalorder %s18, 0
    %p144 = por %p142, %p143
    %p145 = scmp.ne.s32.totalorder %s133, %s134
    %p146 = scmp.eq.s32.totalorder %s19, 1
    %p147 = por %p145, %p146
    %p149 = scmp.ne.s32.totalorder %s134, %s148
    %p150 = scmp.eq.s32.totalorder %s19, 0
    %p151 = por %p149, %p150
    %s153 = sadd.s32 %s152, 1
    %p156 = scmp.eq.s32.totalorder %s13, 1
    %p157 = scmp.ne.s32.totalorder %s152, %s154
    %p158 = scmp.eq.s32.totalorder %s13, 0
    %p159 = por %p157, %p158
    %p160 = scmp.ne.s32.totalorder %s152, %s154
    %p161 = scmp.eq.s32.totalorder %s18, 1
    %p162 = por %p160, %p161
    %p163 = scmp.ne.s32.totalorder %s154, %s155
    %p164 = scmp.eq.s32.totalorder %s18, 0
    %p165 = por %p163, %p164
    %p166 = scmp.ne.s32.totalorder %s154, %s155
    %p167 = scmp.eq.s32.totalorder %s19, 1
    %p168 = por %p166, %p167
    %p170 = scmp.ne.s32.totalorder %s155, %s169
    %p171 = scmp.eq.s32.totalorder %s19, 0
    %p172 = por %p170, %p171
    %s173 = ssub.s32 %s13, %s20
    %p174 = scmp.eq.s32.totalorder %s173, 0
    %s176 = sadd.s32 %s175, 1
    %s177 = scalar_select %p174, %s175, %s176
    %p180 = pneg %p174
    %p181 = scmp.eq.s32.totalorder %s13, 1
    %p182 = por %p180, %p181
    %p183 = scmp.ne.s32.totalorder %s175, %s178
    %p184 = scmp.eq.s32.totalorder %s13, 0
    %p185 = por %p183, %p184
    %p186 = scmp.ne.s32.totalorder %s175, %s178
    %p187 = scmp.eq.s32.totalorder %s18, 1
    %p188 = por %p186, %p187
    %p189 = scmp.ne.s32.totalorder %s178, %s179
    %p190 = scmp.eq.s32.totalorder %s18, 0
    %p191 = por %p189, %p190
    %p192 = scmp.ne.s32.totalorder %s178, %s179
    %p193 = scmp.eq.s32.totalorder %s19, 1
    %p194 = por %p192, %p193
    %p196 = scmp.ne.s32.totalorder %s179, %s195
    %p197 = scmp.eq.s32.totalorder %s19, 0
    %p198 = por %p196, %p197
    %p199 = scmp.le.s32.totalorder 1, %s13
    %p200 = scmp.lt.s32.totalorder %s13, 3
    %p201 = pnand %p199, %p200
    %p202 = pneg %p201
    // Predicated region
    $region9: #{mnist_net_forward.1} parent=5 // pred_check
      _
    $region10: #{mnist_net_forward.1} parent=5 // pred_check_branch
      %204 = sbr.rel (%p201) target = $region12
    $region11: #{mnist_net_forward.1} parent=5 // pred_region
      %s205 = ssub.s32 %s13, 1
      // Predicated region
      $region13: #{mnist_net_forward.1} parent=11 // pred_check
        %p206 = pneg %p60
      $region14: #{mnist_net_forward.1} parent=11 // pred_check_branch
        %208 = sbr.rel (%p206) target = $region16
      $region15: #{mnist_net_forward.1} parent=11 // pred_region
        _
      $region16: #{mnist_net_forward.1} parent=11 // pred_fallthru
        _
      // Predicated region
      $region17: #{mnist_net_forward.1} parent=11 // pred_check
        %p209 = pneg %p81
      $region18: #{mnist_net_forward.1} parent=11 // pred_check_branch
        %211 = sbr.rel (%p209) target = $region20
      $region19: #{mnist_net_forward.1} parent=11 // pred_region
        _
      $region20: #{mnist_net_forward.1} parent=11 // pred_fallthru
        _
      // Predicated region
      $region21: #{mnist_net_forward.1} parent=11 // pred_check
        %p212 = pneg %p102
      $region22: #{mnist_net_forward.1} parent=11 // pred_check_branch
        %214 = sbr.rel (%p212) target = $region24
      $region23: #{mnist_net_forward.1} parent=11 // pred_region
        _
      $region24: #{mnist_net_forward.1} parent=11 // pred_fallthru
        _
      // Predicated region
      $region25: #{mnist_net_forward.1} parent=11 // pred_check
        %p215 = pneg %p123
      $region26: #{mnist_net_forward.1} parent=11 // pred_check_branch
        %217 = sbr.rel (%p215) target = $region28
      $region27: #{mnist_net_forward.1} parent=11 // pred_region
        _
      $region28: #{mnist_net_forward.1} parent=11 // pred_fallthru
        _
      // Predicated region
      $region29: #{mnist_net_forward.1} parent=11 // pred_check
        %p218 = pneg %p144
      $region30: #{mnist_net_forward.1} parent=11 // pred_check_branch
        %220 = sbr.rel (%p218) target = $region32
      $region31: #{mnist_net_forward.1} parent=11 // pred_region
        _
      $region32: #{mnist_net_forward.1} parent=11 // pred_fallthru
        _
      // Predicated region
      $region33: #{mnist_net_forward.1} parent=11 // pred_check
        %p221 = pneg %p165
      $region34: #{mnist_net_forward.1} parent=11 // pred_check_branch
        %223 = sbr.rel (%p221) target = $region36
      $region35: #{mnist_net_forward.1} parent=11 // pred_region
        _
      $region36: #{mnist_net_forward.1} parent=11 // pred_fallthru
        _
    $region12: #{mnist_net_forward.1} parent=5 // pred_fallthru
      _
    %p224 = scmp.lt.s32.totalorder %s13, 2
    // Predicated region
    $region37: #{mnist_net_forward.1} parent=5 // pred_check
      %p225 = pneg %p224
    $region38: #{mnist_net_forward.1} parent=5 // pred_check_branch
      %227 = sbr.rel (%p225) target = $region40
    $region39: #{mnist_net_forward.1} parent=5 // pred_region
      // Predicated region
      $region41: #{mnist_net_forward.1} parent=39 // pred_check
        %p228 = pneg %p33
      $region42: #{mnist_net_forward.1} parent=39 // pred_check_branch
        %230 = sbr.rel (%p228) target = $region44
      $region43: #{mnist_net_forward.1} parent=39 // pred_region
        %p231 = scmp.lt.s32.totalorder %s13, 1
        %s232 = scalar_select %p231, %s13, 1
        %s233 = smul.addr %s232, 4
        %s234 = smul.addr %s233, 8
        %s235 = scalar_lea.vmem %s0, %s234
      $region44: #{mnist_net_forward.1} parent=39 // pred_fallthru
        _
    $region40: #{mnist_net_forward.1} parent=5 // pred_fallthru
      _
    %p236 = scmp.le.s32.totalorder 1, %s13
    %p237 = scmp.lt.s32.totalorder %s13, 3
    %p238 = pnand %p236, %p237
    %p239 = pneg %p238
    // Predicated region
    $region45: #{mnist_net_forward.1} parent=5 // pred_check
      _
    $region46: #{mnist_net_forward.1} parent=5 // pred_check_branch
      %241 = sbr.rel (%p238) target = $region48
    $region47: #{mnist_net_forward.1} parent=5 // pred_region
      %s242 = ssub.s32 %s13, 1
      %p243 = scmp.lt.s32.totalorder %s18, 1
      %s244 = scalar_select %p243, %s18, 1
      %s245 = smul.addr %s244, 4
      %s246 = smul.addr %s245, 8
      %s247 = scalar_lea.vmem %s0, %s246
      %p248 = pneg %p39
      %p249 = pneg %p36
      %p250 = pneg %p60
      %p251 = pneg %p57
      %p252 = pneg %p81
      %p253 = pneg %p78
      %p254 = pneg %p102
      %p255 = pneg %p99
      %p256 = pneg %p123
      %p257 = pneg %p120
      %p258 = pneg %p144
      %p259 = pneg %p141
      %p260 = pneg %p165
      %p261 = pneg %p162
      %p262 = pneg %p191
      %p263 = pneg %p188
      %p264 = scmp.lt.s32.totalorder %s18, 1
      %s265 = scalar_select %p264, %s18, 1
      %s266 = smul.addr %s265, 2
      %s267 = smul.addr %s266, 8
      %s268 = scalar_lea.vmem %s7, %s267
      %p269 = scmp.lt.s32.totalorder %s18, 1
      %s270 = scalar_select %p269, %s18, 1
      %s271 = smul.addr %s270, 4
      %s272 = smul.addr %s271, 8
      %s273 = scalar_lea.vmem %s0, %s272
      %p274 = scmp.lt.s32.totalorder %s18, 1
      %s275 = scalar_select %p274, %s18, 1
      %s276 = smul.addr %s275, 2
      %s277 = smul.addr %s276, 8
      %s278 = scalar_lea.vmem %s7, %s277
      %v279 = vld [vmem:[%s273] sm:$0xff]
      %v280 = vld [vmem:[%s273 + $0x8] sm:$0xff]
      %v281 = vld [vmem:[%s273 + $0x10] sm:$0xff]
      %v282 = vld [vmem:[%s273 + $0x18] sm:$0xff]
      %v283 = vld [vmem:[%s1] sm:$0xff]
      %vm284 = vcmask 130048
      %v286 = vsel %vm284, %v283, 0
      %288 = vmatpush.msra.mxu0 0.0
      %289 = vmatpush.msra.mxu0 0.0
      %290 = vmatpush.msra.mxu0 0.0
      %291 = vmatpush.msra.mxu0 0.0
      %292 = vmatpush.msra.mxu0 0.0
      %293 = vmatpush.msra.mxu0 0.0
      %294 = vmatpush.msra.mxu0 0.0
      %295 = vmatpush.msra.mxu0 0.0
      %296 = vmatpush.msra.mxu0 0.0
      %297 = vmatpush.msra.mxu0 0.0
      %298 = vmatpush.msra.mxu0 0.0
      %299 = vmatpush.msra.mxu0 0.0
      %300 = vmatpush.msra.mxu0 0.0
      %301 = vmatpush.msra.mxu0 0.0
      %302 = vmatpush.msra.mxu0 %v281
      %303 = vmatpush.msra.mxu0 %v279
      %304 = vmatmul.f32.gmra.mxu0 %v286
      %v305 = vpop.f32.mrf.mxu0
      %v306 = vadd.f32 0.0, %v305
      %307 = vdwg.mxu0
      %308 = vmatpush.msra.mxu0 0.0
      %309 = vmatpush.msra.mxu0 0.0
      %310 = vmatpush.msra.mxu0 0.0
      %311 = vmatpush.msra.mxu0 0.0
      %312 = vmatpush.msra.mxu0 0.0
      %313 = vmatpush.msra.mxu0 0.0
      %314 = vmatpush.msra.mxu0 0.0
      %315 = vmatpush.msra.mxu0 0.0
      %316 = vmatpush.msra.mxu0 0.0
      %317 = vmatpush.msra.mxu0 0.0
      %318 = vmatpush.msra.mxu0 0.0
      %319 = vmatpush.msra.mxu0 0.0
      %320 = vmatpush.msra.mxu0 0.0
      %321 = vmatpush.msra.mxu0 0.0
      %322 = vmatpush.msra.mxu0 %v282
      %323 = vmatpush.msra.mxu0 %v280
      %324 = vmatmul.f32.gmra.mxu0 %v286
      %v325 = vpop.f32.mrf.mxu0
      %v326 = vadd.f32 0.0, %v325
      %327 = vdwg.mxu0
      %v328 = vmax.f32 %v306, 0.0
      %v329 = vmax.f32 %v326, 0.0
      %v330 = vld [vmem:[%s2] sm:$0xff]
      %v331 = vld [vmem:[%s2 + $0x8] sm:$0xff]
      %v332 = vld [vmem:[%s2 + $0x10] sm:$0xff]
      %v333 = vld [vmem:[%s2 + $0x18] sm:$0xff]
      %v334 = vld [vmem:[%s2 + $0x20] sm:$0xff]
      %v335 = vld [vmem:[%s2 + $0x28] sm:$0xff]
      %v336 = vld [vmem:[%s2 + $0x30] sm:$0xff]
      %v337 = vld [vmem:[%s2 + $0x38] sm:$0xff]
      %v338 = vld [vmem:[%s2 + $0x40] sm:$0xff]
      %v339 = vld [vmem:[%s2 + $0x48] sm:$0xff]
      %v340 = vld [vmem:[%s2 + $0x50] sm:$0xff]
      %v341 = vld [vmem:[%s2 + $0x58] sm:$0xff]
      %v342 = vld [vmem:[%s2 + $0x60] sm:$0xff]
      %v343 = vld [vmem:[%s2 + $0x68] sm:$0xff]
      %v344 = vld [vmem:[%s2 + $0x70] sm:$0xff]
      %v345 = vld [vmem:[%s2 + $0x78] sm:$0xff]
      %v346 = vld [vmem:[%s2 + $0x80] sm:$0xff]
      %v347 = vld [vmem:[%s2 + $0x88] sm:$0xff]
      %v348 = vld [vmem:[%s2 + $0x90] sm:$0xff]
      %v349 = vld [vmem:[%s2 + $0x98] sm:$0xff]
      %v350 = vld [vmem:[%s2 + $0xa0] sm:$0xff]
      %v351 = vld [vmem:[%s2 + $0xa8] sm:$0xff]
      %v352 = vld [vmem:[%s2 + $0xb0] sm:$0xff]
      %v353 = vld [vmem:[%s2 + $0xb8] sm:$0xff]
      %v354 = vld [vmem:[%s2 + $0xc0] sm:$0xff]
      %v355 = vld [vmem:[%s2 + $0xc8] sm:$0xff]
      %v356 = vld [vmem:[%s2 + $0xd0] sm:$0xff]
      %v357 = vld [vmem:[%s2 + $0xd8] sm:$0xff]
      %v358 = vld [vmem:[%s2 + $0xe0] sm:$0xff]
      %v359 = vld [vmem:[%s2 + $0xe8] sm:$0xff]
      %v360 = vld [vmem:[%s2 + $0xf0] sm:$0xff]
      %v361 = vld [vmem:[%s2 + $0xf8] sm:$0xff]
      %v362 = vld [vmem:[%s2 + $0x100] sm:$0xff]
      %v363 = vld [vmem:[%s2 + $0x108] sm:$0xff]
      %v364 = vld [vmem:[%s2 + $0x110] sm:$0xff]
      %v365 = vld [vmem:[%s2 + $0x118] sm:$0xff]
      %v366 = vld [vmem:[%s2 + $0x120] sm:$0xff]
      %v367 = vld [vmem:[%s2 + $0x128] sm:$0xff]
      %v368 = vld [vmem:[%s2 + $0x130] sm:$0xff]
      %v369 = vld [vmem:[%s2 + $0x138] sm:$0xff]
      %v370 = vld [vmem:[%s2 + $0x140] sm:$0xff]
      %v371 = vld [vmem:[%s2 + $0x148] sm:$0xff]
      %v372 = vld [vmem:[%s2 + $0x150] sm:$0xff]
      %v373 = vld [vmem:[%s2 + $0x158] sm:$0xff]
      %v374 = vld [vmem:[%s2 + $0x160] sm:$0xff]
      %v375 = vld [vmem:[%s2 + $0x168] sm:$0xff]
      %v376 = vld [vmem:[%s2 + $0x170] sm:$0xff]
      %v377 = vld [vmem:[%s2 + $0x178] sm:$0xff]
      %v378 = vld [vmem:[%s2 + $0x180] sm:$0xff]
      %v379 = vld [vmem:[%s2 + $0x188] sm:$0xff]
      %v380 = vld [vmem:[%s2 + $0x190] sm:$0xff]
      %v381 = vld [vmem:[%s2 + $0x198] sm:$0xff]
      %v382 = vld [vmem:[%s2 + $0x1a0] sm:$0xff]
      %v383 = vld [vmem:[%s2 + $0x1a8] sm:$0xff]
      %v384 = vld [vmem:[%s2 + $0x1b0] sm:$0xff]
      %v385 = vld [vmem:[%s2 + $0x1b8] sm:$0xff]
      %v386 = vld [vmem:[%s2 + $0x1c0] sm:$0xff]
      %v387 = vld [vmem:[%s2 + $0x1c8] sm:$0xff]
      %v388 = vld [vmem:[%s2 + $0x1d0] sm:$0xff]
      %v389 = vld [vmem:[%s2 + $0x1d8] sm:$0xff]
      %v390 = vld [vmem:[%s2 + $0x1e0] sm:$0xff]
      %v391 = vld [vmem:[%s2 + $0x1e8] sm:$0xff]
      %v392 = vld [vmem:[%s2 + $0x1f0] sm:$0xff]
      %v393 = vld [vmem:[%s2 + $0x1f8] sm:$0xff]
      %v394 = vld [vmem:[%s2 + $0x200] sm:$0xff]
      %v395 = vld [vmem:[%s2 + $0x208] sm:$0xff]
      %v396 = vld [vmem:[%s2 + $0x210] sm:$0xff]
      %v397 = vld [vmem:[%s2 + $0x218] sm:$0xff]
      %v398 = vld [vmem:[%s2 + $0x220] sm:$0xff]
      %v399 = vld [vmem:[%s2 + $0x228] sm:$0xff]
      %v400 = vld [vmem:[%s2 + $0x230] sm:$0xff]
      %v401 = vld [vmem:[%s2 + $0x238] sm:$0xff]
      %v402 = vld [vmem:[%s2 + $0x240] sm:$0xff]
      %v403 = vld [vmem:[%s2 + $0x248] sm:$0xff]
      %v404 = vld [vmem:[%s2 + $0x250] sm:$0xff]
      %v405 = vld [vmem:[%s2 + $0x258] sm:$0xff]
      %v406 = vld [vmem:[%s2 + $0x260] sm:$0xff]
      %v407 = vld [vmem:[%s2 + $0x268] sm:$0xff]
      %v408 = vld [vmem:[%s2 + $0x270] sm:$0xff]
      %v409 = vld [vmem:[%s2 + $0x278] sm:$0xff]
      %v410 = vld [vmem:[%s2 + $0x280] sm:$0xff]
      %v411 = vld [vmem:[%s2 + $0x288] sm:$0xff]
      %v412 = vld [vmem:[%s2 + $0x290] sm:$0xff]
      %v413 = vld [vmem:[%s2 + $0x298] sm:$0xff]
      %v414 = vld [vmem:[%s2 + $0x2a0] sm:$0xff]
      %v415 = vld [vmem:[%s2 + $0x2a8] sm:$0xff]
      %v416 = vld [vmem:[%s2 + $0x2b0] sm:$0xff]
      %v417 = vld [vmem:[%s2 + $0x2b8] sm:$0xff]
      %v418 = vld [vmem:[%s2 + $0x2c0] sm:$0xff]
      %v419 = vld [vmem:[%s2 + $0x2c8] sm:$0xff]
      %v420 = vld [vmem:[%s2 + $0x2d0] sm:$0xff]
      %v421 = vld [vmem:[%s2 + $0x2d8] sm:$0xff]
      %v422 = vld [vmem:[%s2 + $0x2e0] sm:$0xff]
      %v423 = vld [vmem:[%s2 + $0x2e8] sm:$0xff]
      %v424 = vld [vmem:[%s2 + $0x2f0] sm:$0xff]
      %v425 = vld [vmem:[%s2 + $0x2f8] sm:$0xff]
      %v426 = vld [vmem:[%s2 + $0x300] sm:$0xff]
      %v427 = vld [vmem:[%s2 + $0x308] sm:$0xff]
      %v428 = vld [vmem:[%s2 + $0x310] sm:$0xff]
      %v429 = vld [vmem:[%s2 + $0x318] sm:$0xff]
      %v430 = vld [vmem:[%s2 + $0x320] sm:$0xff]
      %v431 = vld [vmem:[%s2 + $0x328] sm:$0xff]
      %v432 = vld [vmem:[%s2 + $0x330] sm:$0xff]
      %v433 = vld [vmem:[%s2 + $0x338] sm:$0xff]
      %v434 = vld [vmem:[%s2 + $0x340] sm:$0xff]
      %v435 = vld [vmem:[%s2 + $0x348] sm:$0xff]
      %v436 = vld [vmem:[%s2 + $0x350] sm:$0xff]
      %v437 = vld [vmem:[%s2 + $0x358] sm:$0xff]
      %v438 = vld [vmem:[%s2 + $0x360] sm:$0xff]
      %v439 = vld [vmem:[%s2 + $0x368] sm:$0xff]
      %v440 = vld [vmem:[%s2 + $0x370] sm:$0xff]
      %v441 = vld [vmem:[%s2 + $0x378] sm:$0xff]
      %v442 = vld [vmem:[%s2 + $0x380] sm:$0xff]
      %v443 = vld [vmem:[%s2 + $0x388] sm:$0xff]
      %v444 = vld [vmem:[%s2 + $0x390] sm:$0xff]
      %v445 = vld [vmem:[%s2 + $0x398] sm:$0xff]
      %v446 = vld [vmem:[%s2 + $0x3a0] sm:$0xff]
      %v447 = vld [vmem:[%s2 + $0x3a8] sm:$0xff]
      %v448 = vld [vmem:[%s2 + $0x3b0] sm:$0xff]
      %v449 = vld [vmem:[%s2 + $0x3b8] sm:$0xff]
      %v450 = vld [vmem:[%s2 + $0x3c0] sm:$0xff]
      %v451 = vld [vmem:[%s2 + $0x3c8] sm:$0xff]
      %v452 = vld [vmem:[%s2 + $0x3d0] sm:$0xff]
      %v453 = vld [vmem:[%s2 + $0x3d8] sm:$0xff]
      %v454 = vld [vmem:[%s2 + $0x3e0] sm:$0xff]
      %v455 = vld [vmem:[%s2 + $0x3e8] sm:$0xff]
      %v456 = vld [vmem:[%s2 + $0x3f0] sm:$0xff]
      %v457 = vld [vmem:[%s2 + $0x3f8] sm:$0xff]
      %v458 = vld [vmem:[%s2 + $0x400] sm:$0xff]
      %v459 = vld [vmem:[%s2 + $0x408] sm:$0xff]
      %v460 = vld [vmem:[%s2 + $0x410] sm:$0xff]
      %v461 = vld [vmem:[%s2 + $0x418] sm:$0xff]
      %v462 = vld [vmem:[%s2 + $0x420] sm:$0xff]
      %v463 = vld [vmem:[%s2 + $0x428] sm:$0xff]
      %v464 = vld [vmem:[%s2 + $0x430] sm:$0xff]
      %v465 = vld [vmem:[%s2 + $0x438] sm:$0xff]
      %v466 = vld [vmem:[%s2 + $0x440] sm:$0xff]
      %v467 = vld [vmem:[%s2 + $0x448] sm:$0xff]
      %v468 = vld [vmem:[%s2 + $0x450] sm:$0xff]
      %v469 = vld [vmem:[%s2 + $0x458] sm:$0xff]
      %v470 = vld [vmem:[%s2 + $0x460] sm:$0xff]
      %v471 = vld [vmem:[%s2 + $0x468] sm:$0xff]
      %v472 = vld [vmem:[%s2 + $0x470] sm:$0xff]
      %v473 = vld [vmem:[%s2 + $0x478] sm:$0xff]
      %v474 = vld [vmem:[%s2 + $0x480] sm:$0xff]
      %v475 = vld [vmem:[%s2 + $0x488] sm:$0xff]
      %v476 = vld [vmem:[%s2 + $0x490] sm:$0xff]
      %v477 = vld [vmem:[%s2 + $0x498] sm:$0xff]
      %v478 = vld [vmem:[%s2 + $0x4a0] sm:$0xff]
      %v479 = vld [vmem:[%s2 + $0x4a8] sm:$0xff]
      %v480 = vld [vmem:[%s2 + $0x4b0] sm:$0xff]
      %v481 = vld [vmem:[%s2 + $0x4b8] sm:$0xff]
      %v482 = vld [vmem:[%s2 + $0x4c0] sm:$0xff]
      %v483 = vld [vmem:[%s2 + $0x4c8] sm:$0xff]
      %v484 = vld [vmem:[%s2 + $0x4d0] sm:$0xff]
      %v485 = vld [vmem:[%s2 + $0x4d8] sm:$0xff]
      %v486 = vld [vmem:[%s2 + $0x4e0] sm:$0xff]
      %v487 = vld [vmem:[%s2 + $0x4e8] sm:$0xff]
      %v488 = vld [vmem:[%s2 + $0x4f0] sm:$0xff]
      %v489 = vld [vmem:[%s2 + $0x4f8] sm:$0xff]
      %v490 = vld [vmem:[%s2 + $0x500] sm:$0xff]
      %v491 = vld [vmem:[%s2 + $0x508] sm:$0xff]
      %v492 = vld [vmem:[%s2 + $0x510] sm:$0xff]
      %v493 = vld [vmem:[%s2 + $0x518] sm:$0xff]
      %v494 = vld [vmem:[%s2 + $0x520] sm:$0xff]
      %v495 = vld [vmem:[%s2 + $0x528] sm:$0xff]
      %v496 = vld [vmem:[%s2 + $0x530] sm:$0xff]
      %v497 = vld [vmem:[%s2 + $0x538] sm:$0xff]
      %v498 = vld [vmem:[%s2 + $0x540] sm:$0xff]
      %v499 = vld [vmem:[%s2 + $0x548] sm:$0xff]
      %v500 = vld [vmem:[%s2 + $0x550] sm:$0xff]
      %v501 = vld [vmem:[%s2 + $0x558] sm:$0xff]
      %v502 = vld [vmem:[%s2 + $0x560] sm:$0xff]
      %v503 = vld [vmem:[%s2 + $0x568] sm:$0xff]
      %v504 = vld [vmem:[%s2 + $0x570] sm:$0xff]
      %v505 = vld [vmem:[%s2 + $0x578] sm:$0xff]
      %v506 = vld [vmem:[%s2 + $0x580] sm:$0xff]
      %v507 = vld [vmem:[%s2 + $0x588] sm:$0xff]
      %v508 = vld [vmem:[%s2 + $0x590] sm:$0xff]
      %v509 = vld [vmem:[%s2 + $0x598] sm:$0xff]
      %v510 = vld [vmem:[%s2 + $0x5a0] sm:$0xff]
      %v511 = vld [vmem:[%s2 + $0x5a8] sm:$0xff]
      %v512 = vld [vmem:[%s2 + $0x5b0] sm:$0xff]
      %v513 = vld [vmem:[%s2 + $0x5b8] sm:$0xff]
      %v514 = vld [vmem:[%s2 + $0x5c0] sm:$0xff]
      %v515 = vld [vmem:[%s2 + $0x5c8] sm:$0xff]
      %v516 = vld [vmem:[%s2 + $0x5d0] sm:$0xff]
      %v517 = vld [vmem:[%s2 + $0x5d8] sm:$0xff]
      %v518 = vld [vmem:[%s2 + $0x5e0] sm:$0xff]
      %v519 = vld [vmem:[%s2 + $0x5e8] sm:$0xff]
      %v520 = vld [vmem:[%s2 + $0x5f0] sm:$0xff]
      %v521 = vld [vmem:[%s2 + $0x5f8] sm:$0xff]
      %v522 = vld [vmem:[%s2 + $0x600] sm:$0xff]
      %v523 = vld [vmem:[%s2 + $0x608] sm:$0xff]
      %v524 = vld [vmem:[%s2 + $0x610] sm:$0xff]
      %v525 = vld [vmem:[%s2 + $0x618] sm:$0xff]
      %v526 = vld [vmem:[%s2 + $0x620] sm:$0xff]
      %v527 = vld [vmem:[%s2 + $0x628] sm:$0xff]
      %v528 = vld [vmem:[%s2 + $0x630] sm:$0xff]
      %v529 = vld [vmem:[%s2 + $0x638] sm:$0xff]
      %v530 = vld [vmem:[%s2 + $0x640] sm:$0xff]
      %v531 = vld [vmem:[%s2 + $0x648] sm:$0xff]
      %v532 = vld [vmem:[%s2 + $0x650] sm:$0xff]
      %v533 = vld [vmem:[%s2 + $0x658] sm:$0xff]
      %v534 = vld [vmem:[%s2 + $0x660] sm:$0xff]
      %v535 = vld [vmem:[%s2 + $0x668] sm:$0xff]
      %v536 = vld [vmem:[%s2 + $0x670] sm:$0xff]
      %v537 = vld [vmem:[%s2 + $0x678] sm:$0xff]
      %v538 = vld [vmem:[%s2 + $0x680] sm:$0xff]
      %v539 = vld [vmem:[%s2 + $0x688] sm:$0xff]
      %v540 = vld [vmem:[%s2 + $0x690] sm:$0xff]
      %v541 = vld [vmem:[%s2 + $0x698] sm:$0xff]
      %v542 = vld [vmem:[%s2 + $0x6a0] sm:$0xff]
      %v543 = vld [vmem:[%s2 + $0x6a8] sm:$0xff]
      %v544 = vld [vmem:[%s2 + $0x6b0] sm:$0xff]
      %v545 = vld [vmem:[%s2 + $0x6b8] sm:$0xff]
      %v546 = vld [vmem:[%s2 + $0x6c0] sm:$0xff]
      %v547 = vld [vmem:[%s2 + $0x6c8] sm:$0xff]
      %v548 = vld [vmem:[%s2 + $0x6d0] sm:$0xff]
      %v549 = vld [vmem:[%s2 + $0x6d8] sm:$0xff]
      %v550 = vld [vmem:[%s2 + $0x6e0] sm:$0xff]
      %v551 = vld [vmem:[%s2 + $0x6e8] sm:$0xff]
      %v552 = vld [vmem:[%s2 + $0x6f0] sm:$0xff]
      %v553 = vld [vmem:[%s2 + $0x6f8] sm:$0xff]
      %v554 = vld [vmem:[%s2 + $0x700] sm:$0xff]
      %v555 = vld [vmem:[%s2 + $0x708] sm:$0xff]
      %v556 = vld [vmem:[%s2 + $0x710] sm:$0xff]
      %v557 = vld [vmem:[%s2 + $0x718] sm:$0xff]
      %v558 = vld [vmem:[%s2 + $0x720] sm:$0xff]
      %v559 = vld [vmem:[%s2 + $0x728] sm:$0xff]
      %v560 = vld [vmem:[%s2 + $0x730] sm:$0xff]
      %v561 = vld [vmem:[%s2 + $0x738] sm:$0xff]
      %v562 = vld [vmem:[%s2 + $0x740] sm:$0xff]
      %v563 = vld [vmem:[%s2 + $0x748] sm:$0xff]
      %v564 = vld [vmem:[%s2 + $0x750] sm:$0xff]
      %v565 = vld [vmem:[%s2 + $0x758] sm:$0xff]
      %v566 = vld [vmem:[%s2 + $0x760] sm:$0xff]
      %v567 = vld [vmem:[%s2 + $0x768] sm:$0xff]
      %v568 = vld [vmem:[%s2 + $0x770] sm:$0xff]
      %v569 = vld [vmem:[%s2 + $0x778] sm:$0xff]
      %v570 = vld [vmem:[%s2 + $0x780] sm:$0xff]
      %v571 = vld [vmem:[%s2 + $0x788] sm:$0xff]
      %v572 = vld [vmem:[%s2 + $0x790] sm:$0xff]
      %v573 = vld [vmem:[%s2 + $0x798] sm:$0xff]
      %v574 = vld [vmem:[%s2 + $0x7a0] sm:$0xff]
      %v575 = vld [vmem:[%s2 + $0x7a8] sm:$0xff]
      %v576 = vld [vmem:[%s2 + $0x7b0] sm:$0xff]
      %v577 = vld [vmem:[%s2 + $0x7b8] sm:$0xff]
      %v578 = vld [vmem:[%s2 + $0x7c0] sm:$0xff]
      %v579 = vld [vmem:[%s2 + $0x7c8] sm:$0xff]
      %v580 = vld [vmem:[%s2 + $0x7d0] sm:$0xff]
      %v581 = vld [vmem:[%s2 + $0x7d8] sm:$0xff]
      %v582 = vld [vmem:[%s2 + $0x7e0] sm:$0xff]
      %v583 = vld [vmem:[%s2 + $0x7e8] sm:$0xff]
      %v584 = vld [vmem:[%s2 + $0x7f0] sm:$0xff]
      %v585 = vld [vmem:[%s2 + $0x7f8] sm:$0xff]
      %v586 = vld [vmem:[%s2 + $0x800] sm:$0xff]
      %v587 = vld [vmem:[%s2 + $0x808] sm:$0xff]
      %v588 = vld [vmem:[%s2 + $0x810] sm:$0xff]
      %v589 = vld [vmem:[%s2 + $0x818] sm:$0xff]
      %v590 = vld [vmem:[%s2 + $0x820] sm:$0xff]
      %v591 = vld [vmem:[%s2 + $0x828] sm:$0xff]
      %v592 = vld [vmem:[%s2 + $0x830] sm:$0xff]
      %v593 = vld [vmem:[%s2 + $0x838] sm:$0xff]
      %v594 = vld [vmem:[%s2 + $0x840] sm:$0xff]
      %v595 = vld [vmem:[%s2 + $0x848] sm:$0xff]
      %v596 = vld [vmem:[%s2 + $0x850] sm:$0xff]
      %v597 = vld [vmem:[%s2 + $0x858] sm:$0xff]
      %v598 = vld [vmem:[%s2 + $0x860] sm:$0xff]
      %v599 = vld [vmem:[%s2 + $0x868] sm:$0xff]
      %v600 = vld [vmem:[%s2 + $0x870] sm:$0xff]
      %v601 = vld [vmem:[%s2 + $0x878] sm:$0xff]
      %v602 = vld [vmem:[%s2 + $0x880] sm:$0xff]
      %v603 = vld [vmem:[%s2 + $0x888] sm:$0xff]
      %v604 = vld [vmem:[%s2 + $0x890] sm:$0xff]
      %v605 = vld [vmem:[%s2 + $0x898] sm:$0xff]
      %v606 = vld [vmem:[%s2 + $0x8a0] sm:$0xff]
      %v607 = vld [vmem:[%s2 + $0x8a8] sm:$0xff]
      %v608 = vld [vmem:[%s2 + $0x8b0] sm:$0xff]
      %v609 = vld [vmem:[%s2 + $0x8b8] sm:$0xff]
      %v610 = vld [vmem:[%s2 + $0x8c0] sm:$0xff]
      %v611 = vld [vmem:[%s2 + $0x8c8] sm:$0xff]
      %v612 = vld [vmem:[%s2 + $0x8d0] sm:$0xff]
      %v613 = vld [vmem:[%s2 + $0x8d8] sm:$0xff]
      %v614 = vld [vmem:[%s2 + $0x8e0] sm:$0xff]
      %v615 = vld [vmem:[%s2 + $0x8e8] sm:$0xff]
      %v616 = vld [vmem:[%s2 + $0x8f0] sm:$0xff]
      %v617 = vld [vmem:[%s2 + $0x8f8] sm:$0xff]
      %v618 = vld [vmem:[%s2 + $0x900] sm:$0xff]
      %v619 = vld [vmem:[%s2 + $0x908] sm:$0xff]
      %v620 = vld [vmem:[%s2 + $0x910] sm:$0xff]
      %v621 = vld [vmem:[%s2 + $0x918] sm:$0xff]
      %v622 = vld [vmem:[%s2 + $0x920] sm:$0xff]
      %v623 = vld [vmem:[%s2 + $0x928] sm:$0xff]
      %v624 = vld [vmem:[%s2 + $0x930] sm:$0xff]
      %v625 = vld [vmem:[%s2 + $0x938] sm:$0xff]
      %v626 = vld [vmem:[%s2 + $0x940] sm:$0xff]
      %v627 = vld [vmem:[%s2 + $0x948] sm:$0xff]
      %v628 = vld [vmem:[%s2 + $0x950] sm:$0xff]
      %v629 = vld [vmem:[%s2 + $0x958] sm:$0xff]
      %v630 = vld [vmem:[%s2 + $0x960] sm:$0xff]
      %v631 = vld [vmem:[%s2 + $0x968] sm:$0xff]
      %v632 = vld [vmem:[%s2 + $0x970] sm:$0xff]
      %v633 = vld [vmem:[%s2 + $0x978] sm:$0xff]
      %v634 = vld [vmem:[%s2 + $0x980] sm:$0xff]
      %v635 = vld [vmem:[%s2 + $0x988] sm:$0xff]
      %v636 = vld [vmem:[%s2 + $0x990] sm:$0xff]
      %v637 = vld [vmem:[%s2 + $0x998] sm:$0xff]
      %v638 = vld [vmem:[%s2 + $0x9a0] sm:$0xff]
      %v639 = vld [vmem:[%s2 + $0x9a8] sm:$0xff]
      %v640 = vld [vmem:[%s2 + $0x9b0] sm:$0xff]
      %v641 = vld [vmem:[%s2 + $0x9b8] sm:$0xff]
      %v642 = vld [vmem:[%s2 + $0x9c0] sm:$0xff]
      %v643 = vld [vmem:[%s2 + $0x9c8] sm:$0xff]
      %v644 = vld [vmem:[%s2 + $0x9d0] sm:$0xff]
      %v645 = vld [vmem:[%s2 + $0x9d8] sm:$0xff]
      %v646 = vld [vmem:[%s2 + $0x9e0] sm:$0xff]
      %v647 = vld [vmem:[%s2 + $0x9e8] sm:$0xff]
      %v648 = vld [vmem:[%s2 + $0x9f0] sm:$0xff]
      %v649 = vld [vmem:[%s2 + $0x9f8] sm:$0xff]
      %v650 = vld [vmem:[%s2 + $0xa00] sm:$0xff]
      %v651 = vld [vmem:[%s2 + $0xa08] sm:$0xff]
      %v652 = vld [vmem:[%s2 + $0xa10] sm:$0xff]
      %v653 = vld [vmem:[%s2 + $0xa18] sm:$0xff]
      %v654 = vld [vmem:[%s2 + $0xa20] sm:$0xff]
      %v655 = vld [vmem:[%s2 + $0xa28] sm:$0xff]
      %v656 = vld [vmem:[%s2 + $0xa30] sm:$0xff]
      %v657 = vld [vmem:[%s2 + $0xa38] sm:$0xff]
      %v658 = vld [vmem:[%s2 + $0xa40] sm:$0xff]
      %v659 = vld [vmem:[%s2 + $0xa48] sm:$0xff]
      %v660 = vld [vmem:[%s2 + $0xa50] sm:$0xff]
      %v661 = vld [vmem:[%s2 + $0xa58] sm:$0xff]
      %v662 = vld [vmem:[%s2 + $0xa60] sm:$0xff]
      %v663 = vld [vmem:[%s2 + $0xa68] sm:$0xff]
      %v664 = vld [vmem:[%s2 + $0xa70] sm:$0xff]
      %v665 = vld [vmem:[%s2 + $0xa78] sm:$0xff]
      %v666 = vld [vmem:[%s2 + $0xa80] sm:$0xff]
      %v667 = vld [vmem:[%s2 + $0xa88] sm:$0xff]
      %v668 = vld [vmem:[%s2 + $0xa90] sm:$0xff]
      %v669 = vld [vmem:[%s2 + $0xa98] sm:$0xff]
      %v670 = vld [vmem:[%s2 + $0xaa0] sm:$0xff]
      %v671 = vld [vmem:[%s2 + $0xaa8] sm:$0xff]
      %v672 = vld [vmem:[%s2 + $0xab0] sm:$0xff]
      %v673 = vld [vmem:[%s2 + $0xab8] sm:$0xff]
      %v674 = vld [vmem:[%s2 + $0xac0] sm:$0xff]
      %v675 = vld [vmem:[%s2 + $0xac8] sm:$0xff]
      %v676 = vld [vmem:[%s2 + $0xad0] sm:$0xff]
      %v677 = vld [vmem:[%s2 + $0xad8] sm:$0xff]
      %v678 = vld [vmem:[%s2 + $0xae0] sm:$0xff]
      %v679 = vld [vmem:[%s2 + $0xae8] sm:$0xff]
      %v680 = vld [vmem:[%s2 + $0xaf0] sm:$0xff]
      %v681 = vld [vmem:[%s2 + $0xaf8] sm:$0xff]
      %v682 = vld [vmem:[%s2 + $0xb00] sm:$0xff]
      %v683 = vld [vmem:[%s2 + $0xb08] sm:$0xff]
      %v684 = vld [vmem:[%s2 + $0xb10] sm:$0xff]
      %v685 = vld [vmem:[%s2 + $0xb18] sm:$0xff]
      %v686 = vld [vmem:[%s2 + $0xb20] sm:$0xff]
      %v687 = vld [vmem:[%s2 + $0xb28] sm:$0xff]
      %v688 = vld [vmem:[%s2 + $0xb30] sm:$0xff]
      %v689 = vld [vmem:[%s2 + $0xb38] sm:$0xff]
      %v690 = vld [vmem:[%s2 + $0xb40] sm:$0xff]
      %v691 = vld [vmem:[%s2 + $0xb48] sm:$0xff]
      %v692 = vld [vmem:[%s2 + $0xb50] sm:$0xff]
      %v693 = vld [vmem:[%s2 + $0xb58] sm:$0xff]
      %v694 = vld [vmem:[%s2 + $0xb60] sm:$0xff]
      %v695 = vld [vmem:[%s2 + $0xb68] sm:$0xff]
      %v696 = vld [vmem:[%s2 + $0xb70] sm:$0xff]
      %v697 = vld [vmem:[%s2 + $0xb78] sm:$0xff]
      %v698 = vld [vmem:[%s2 + $0xb80] sm:$0xff]
      %v699 = vld [vmem:[%s2 + $0xb88] sm:$0xff]
      %v700 = vld [vmem:[%s2 + $0xb90] sm:$0xff]
      %v701 = vld [vmem:[%s2 + $0xb98] sm:$0xff]
      %v702 = vld [vmem:[%s2 + $0xba0] sm:$0xff]
      %v703 = vld [vmem:[%s2 + $0xba8] sm:$0xff]
      %v704 = vld [vmem:[%s2 + $0xbb0] sm:$0xff]
      %v705 = vld [vmem:[%s2 + $0xbb8] sm:$0xff]
      %v706 = vld [vmem:[%s2 + $0xbc0] sm:$0xff]
      %v707 = vld [vmem:[%s2 + $0xbc8] sm:$0xff]
      %v708 = vld [vmem:[%s2 + $0xbd0] sm:$0xff]
      %v709 = vld [vmem:[%s2 + $0xbd8] sm:$0xff]
      %v710 = vld [vmem:[%s2 + $0xbe0] sm:$0xff]
      %v711 = vld [vmem:[%s2 + $0xbe8] sm:$0xff]
      %v712 = vld [vmem:[%s2 + $0xbf0] sm:$0xff]
      %v713 = vld [vmem:[%s2 + $0xbf8] sm:$0xff]
      %v714 = vld [vmem:[%s2 + $0xc00] sm:$0xff]
      %v715 = vld [vmem:[%s2 + $0xc08] sm:$0xff]
      %v716 = vld [vmem:[%s2 + $0xc10] sm:$0xff]
      %v717 = vld [vmem:[%s2 + $0xc18] sm:$0xff]
      %v718 = vld [vmem:[%s2 + $0xc20] sm:$0xff]
      %v719 = vld [vmem:[%s2 + $0xc28] sm:$0xff]
      %v720 = vld [vmem:[%s2 + $0xc30] sm:$0xff]
      %v721 = vld [vmem:[%s2 + $0xc38] sm:$0xff]
      %v722 = vld [vmem:[%s2 + $0xc40] sm:$0xff]
      %v723 = vld [vmem:[%s2 + $0xc48] sm:$0xff]
      %v724 = vld [vmem:[%s2 + $0xc50] sm:$0xff]
      %v725 = vld [vmem:[%s2 + $0xc58] sm:$0xff]
      %v726 = vld [vmem:[%s2 + $0xc60] sm:$0xff]
      %v727 = vld [vmem:[%s2 + $0xc68] sm:$0xff]
      %v728 = vld [vmem:[%s2 + $0xc70] sm:$0xff]
      %v729 = vld [vmem:[%s2 + $0xc78] sm:$0xff]
      %v730 = vld [vmem:[%s2 + $0xc80] sm:$0xff]
      %v731 = vld [vmem:[%s2 + $0xc88] sm:$0xff]
      %v732 = vld [vmem:[%s2 + $0xc90] sm:$0xff]
      %v733 = vld [vmem:[%s2 + $0xc98] sm:$0xff]
      %v734 = vld [vmem:[%s2 + $0xca0] sm:$0xff]
      %v735 = vld [vmem:[%s2 + $0xca8] sm:$0xff]
      %v736 = vld [vmem:[%s2 + $0xcb0] sm:$0xff]
      %v737 = vld [vmem:[%s2 + $0xcb8] sm:$0xff]
      %v738 = vld [vmem:[%s2 + $0xcc0] sm:$0xff]
      %v739 = vld [vmem:[%s2 + $0xcc8] sm:$0xff]
      %v740 = vld [vmem:[%s2 + $0xcd0] sm:$0xff]
      %v741 = vld [vmem:[%s2 + $0xcd8] sm:$0xff]
      %v742 = vld [vmem:[%s2 + $0xce0] sm:$0xff]
      %v743 = vld [vmem:[%s2 + $0xce8] sm:$0xff]
      %v744 = vld [vmem:[%s2 + $0xcf0] sm:$0xff]
      %v745 = vld [vmem:[%s2 + $0xcf8] sm:$0xff]
      %746 = vmatpush.msra.mxu0 %v525
      %747 = vmatpush.msra.mxu0 %v512
      %748 = vmatpush.msra.mxu0 %v499
      %749 = vmatpush.msra.mxu0 %v486
      %750 = vmatpush.msra.mxu0 %v473
      %751 = vmatpush.msra.mxu0 %v460
      %752 = vmatpush.msra.mxu0 %v447
      %753 = vmatpush.msra.mxu0 %v434
      %754 = vmatpush.msra.mxu0 %v421
      %755 = vmatpush.msra.mxu0 %v408
      %756 = vmatpush.msra.mxu0 %v395
      %757 = vmatpush.msra.mxu0 %v382
      %758 = vmatpush.msra.mxu0 %v369
      %759 = vmatpush.msra.mxu0 %v356
      %760 = vmatpush.msra.mxu0 %v343
      %761 = vmatpush.msra.mxu0 %v330
      %762 = vmatmul.f32.gmra.mxu0 %v328
      %v763 = vpop.f32.mrf.mxu0
      %v764 = vadd.f32 0.0, %v763
      %765 = vdwg.mxu0
      %766 = vmatpush.msra.mxu0 %v733
      %767 = vmatpush.msra.mxu0 %v720
      %768 = vmatpush.msra.mxu0 %v707
      %769 = vmatpush.msra.mxu0 %v694
      %770 = vmatpush.msra.mxu0 %v681
      %771 = vmatpush.msra.mxu0 %v668
      %772 = vmatpush.msra.mxu0 %v655
      %773 = vmatpush.msra.mxu0 %v642
      %774 = vmatpush.msra.mxu0 %v629
      %775 = vmatpush.msra.mxu0 %v616
      %776 = vmatpush.msra.mxu0 %v603
      %777 = vmatpush.msra.mxu0 %v590
      %778 = vmatpush.msra.mxu0 %v577
      %779 = vmatpush.msra.mxu0 %v564
      %780 = vmatpush.msra.mxu0 %v551
      %781 = vmatpush.msra.mxu0 %v538
      %782 = vmatmul.f32.gmra.mxu0 %v329
      %v783 = vpop.f32.mrf.mxu0
      %v784 = vadd.f32 %v764, %v783
      %785 = vdwg.mxu0
      %786 = vmatpush.msra.mxu0 %v526
      %787 = vmatpush.msra.mxu0 %v513
      %788 = vmatpush.msra.mxu0 %v500
      %789 = vmatpush.msra.mxu0 %v487
      %790 = vmatpush.msra.mxu0 %v474
      %791 = vmatpush.msra.mxu0 %v461
      %792 = vmatpush.msra.mxu0 %v448
      %793 = vmatpush.msra.mxu0 %v435
      %794 = vmatpush.msra.mxu0 %v422
      %795 = vmatpush.msra.mxu0 %v409
      %796 = vmatpush.msra.mxu0 %v396
      %797 = vmatpush.msra.mxu0 %v383
      %798 = vmatpush.msra.mxu0 %v370
      %799 = vmatpush.msra.mxu0 %v357
      %800 = vmatpush.msra.mxu0 %v344
      %801 = vmatpush.msra.mxu0 %v331
      %802 = vmatmul.f32.gmra.mxu0 %v328
      %v803 = vpop.f32.mrf.mxu0
      %v804 = vadd.f32 0.0, %v803
      %805 = vdwg.mxu0
      %806 = vmatpush.msra.mxu0 %v734
      %807 = vmatpush.msra.mxu0 %v721
      %808 = vmatpush.msra.mxu0 %v708
      %809 = vmatpush.msra.mxu0 %v695
      %810 = vmatpush.msra.mxu0 %v682
      %811 = vmatpush.msra.mxu0 %v669
      %812 = vmatpush.msra.mxu0 %v656
      %813 = vmatpush.msra.mxu0 %v643
      %814 = vmatpush.msra.mxu0 %v630
      %815 = vmatpush.msra.mxu0 %v617
      %816 = vmatpush.msra.mxu0 %v604
      %817 = vmatpush.msra.mxu0 %v591
      %818 = vmatpush.msra.mxu0 %v578
      %819 = vmatpush.msra.mxu0 %v565
      %820 = vmatpush.msra.mxu0 %v552
      %821 = vmatpush.msra.mxu0 %v539
      %822 = vmatmul.f32.gmra.mxu0 %v329
      %v823 = vpop.f32.mrf.mxu0
      %v824 = vadd.f32 %v804, %v823
      %825 = vdwg.mxu0
      %826 = vmatpush.msra.mxu0 %v527
      %827 = vmatpush.msra.mxu0 %v514
      %828 = vmatpush.msra.mxu0 %v501
      %829 = vmatpush.msra.mxu0 %v488
      %830 = vmatpush.msra.mxu0 %v475
      %831 = vmatpush.msra.mxu0 %v462
      %832 = vmatpush.msra.mxu0 %v449
      %833 = vmatpush.msra.mxu0 %v436
      %834 = vmatpush.msra.mxu0 %v423
      %835 = vmatpush.msra.mxu0 %v410
      %836 = vmatpush.msra.mxu0 %v397
      %837 = vmatpush.msra.mxu0 %v384
      %838 = vmatpush.msra.mxu0 %v371
      %839 = vmatpush.msra.mxu0 %v358
      %840 = vmatpush.msra.mxu0 %v345
      %841 = vmatpush.msra.mxu0 %v332
      %842 = vmatmul.f32.gmra.mxu0 %v328
      %v843 = vpop.f32.mrf.mxu0
      %v844 = vadd.f32 0.0, %v843
      %845 = vdwg.mxu0
      %846 = vmatpush.msra.mxu0 %v735
      %847 = vmatpush.msra.mxu0 %v722
      %848 = vmatpush.msra.mxu0 %v709
      %849 = vmatpush.msra.mxu0 %v696
      %850 = vmatpush.msra.mxu0 %v683
      %851 = vmatpush.msra.mxu0 %v670
      %852 = vmatpush.msra.mxu0 %v657
      %853 = vmatpush.msra.mxu0 %v644
      %854 = vmatpush.msra.mxu0 %v631
      %855 = vmatpush.msra.mxu0 %v618
      %856 = vmatpush.msra.mxu0 %v605
      %857 = vmatpush.msra.mxu0 %v592
      %858 = vmatpush.msra.mxu0 %v579
      %859 = vmatpush.msra.mxu0 %v566
      %860 = vmatpush.msra.mxu0 %v553
      %861 = vmatpush.msra.mxu0 %v540
      %862 = vmatmul.f32.gmra.mxu0 %v329
      %v863 = vpop.f32.mrf.mxu0
      %v864 = vadd.f32 %v844, %v863
      %865 = vdwg.mxu0
      %866 = vmatpush.msra.mxu0 %v528
      %867 = vmatpush.msra.mxu0 %v515
      %868 = vmatpush.msra.mxu0 %v502
      %869 = vmatpush.msra.mxu0 %v489
      %870 = vmatpush.msra.mxu0 %v476
      %871 = vmatpush.msra.mxu0 %v463
      %872 = vmatpush.msra.mxu0 %v450
      %873 = vmatpush.msra.mxu0 %v437
      %874 = vmatpush.msra.mxu0 %v424
      %875 = vmatpush.msra.mxu0 %v411
      %876 = vmatpush.msra.mxu0 %v398
      %877 = vmatpush.msra.mxu0 %v385
      %878 = vmatpush.msra.mxu0 %v372
      %879 = vmatpush.msra.mxu0 %v359
      %880 = vmatpush.msra.mxu0 %v346
      %881 = vmatpush.msra.mxu0 %v333
      %882 = vmatmul.f32.gmra.mxu0 %v328
      %v883 = vpop.f32.mrf.mxu0
      %v884 = vadd.f32 0.0, %v883
      %885 = vdwg.mxu0
      %886 = vmatpush.msra.mxu0 %v736
      %887 = vmatpush.msra.mxu0 %v723
      %888 = vmatpush.msra.mxu0 %v710
      %889 = vmatpush.msra.mxu0 %v697
      %890 = vmatpush.msra.mxu0 %v684
      %891 = vmatpush.msra.mxu0 %v671
      %892 = vmatpush.msra.mxu0 %v658
      %893 = vmatpush.msra.mxu0 %v645
      %894 = vmatpush.msra.mxu0 %v632
      %895 = vmatpush.msra.mxu0 %v619
      %896 = vmatpush.msra.mxu0 %v606
      %897 = vmatpush.msra.mxu0 %v593
      %898 = vmatpush.msra.mxu0 %v580
      %899 = vmatpush.msra.mxu0 %v567
      %900 = vmatpush.msra.mxu0 %v554
      %901 = vmatpush.msra.mxu0 %v541
      %902 = vmatmul.f32.gmra.mxu0 %v329
      %v903 = vpop.f32.mrf.mxu0
      %v904 = vadd.f32 %v884, %v903
      %905 = vdwg.mxu0
      %906 = vmatpush.msra.mxu0 %v529
      %907 = vmatpush.msra.mxu0 %v516
      %908 = vmatpush.msra.mxu0 %v503
      %909 = vmatpush.msra.mxu0 %v490
      %910 = vmatpush.msra.mxu0 %v477
      %911 = vmatpush.msra.mxu0 %v464
      %912 = vmatpush.msra.mxu0 %v451
      %913 = vmatpush.msra.mxu0 %v438
      %914 = vmatpush.msra.mxu0 %v425
      %915 = vmatpush.msra.mxu0 %v412
      %916 = vmatpush.msra.mxu0 %v399
      %917 = vmatpush.msra.mxu0 %v386
      %918 = vmatpush.msra.mxu0 %v373
      %919 = vmatpush.msra.mxu0 %v360
      %920 = vmatpush.msra.mxu0 %v347
      %921 = vmatpush.msra.mxu0 %v334
      %922 = vmatmul.f32.gmra.mxu0 %v328
      %v923 = vpop.f32.mrf.mxu0
      %v924 = vadd.f32 0.0, %v923
      %925 = vdwg.mxu0
      %926 = vmatpush.msra.mxu0 %v737
      %927 = vmatpush.msra.mxu0 %v724
      %928 = vmatpush.msra.mxu0 %v711
      %929 = vmatpush.msra.mxu0 %v698
      %930 = vmatpush.msra.mxu0 %v685
      %931 = vmatpush.msra.mxu0 %v672
      %932 = vmatpush.msra.mxu0 %v659
      %933 = vmatpush.msra.mxu0 %v646
      %934 = vmatpush.msra.mxu0 %v633
      %935 = vmatpush.msra.mxu0 %v620
      %936 = vmatpush.msra.mxu0 %v607
      %937 = vmatpush.msra.mxu0 %v594
      %938 = vmatpush.msra.mxu0 %v581
      %939 = vmatpush.msra.mxu0 %v568
      %940 = vmatpush.msra.mxu0 %v555
      %941 = vmatpush.msra.mxu0 %v542
      %942 = vmatmul.f32.gmra.mxu0 %v329
      %v943 = vpop.f32.mrf.mxu0
      %v944 = vadd.f32 %v924, %v943
      %945 = vdwg.mxu0
      %946 = vmatpush.msra.mxu0 %v530
      %947 = vmatpush.msra.mxu0 %v517
      %948 = vmatpush.msra.mxu0 %v504
      %949 = vmatpush.msra.mxu0 %v491
      %950 = vmatpush.msra.mxu0 %v478
      %951 = vmatpush.msra.mxu0 %v465
      %952 = vmatpush.msra.mxu0 %v452
      %953 = vmatpush.msra.mxu0 %v439
      %954 = vmatpush.msra.mxu0 %v426
      %955 = vmatpush.msra.mxu0 %v413
      %956 = vmatpush.msra.mxu0 %v400
      %957 = vmatpush.msra.mxu0 %v387
      %958 = vmatpush.msra.mxu0 %v374
      %959 = vmatpush.msra.mxu0 %v361
      %960 = vmatpush.msra.mxu0 %v348
      %961 = vmatpush.msra.mxu0 %v335
      %962 = vmatmul.f32.gmra.mxu0 %v328
      %v963 = vpop.f32.mrf.mxu0
      %v964 = vadd.f32 0.0, %v963
      %965 = vdwg.mxu0
      %966 = vmatpush.msra.mxu0 %v738
      %967 = vmatpush.msra.mxu0 %v725
      %968 = vmatpush.msra.mxu0 %v712
      %969 = vmatpush.msra.mxu0 %v699
      %970 = vmatpush.msra.mxu0 %v686
      %971 = vmatpush.msra.mxu0 %v673
      %972 = vmatpush.msra.mxu0 %v660
      %973 = vmatpush.msra.mxu0 %v647
      %974 = vmatpush.msra.mxu0 %v634
      %975 = vmatpush.msra.mxu0 %v621
      %976 = vmatpush.msra.mxu0 %v608
      %977 = vmatpush.msra.mxu0 %v595
      %978 = vmatpush.msra.mxu0 %v582
      %979 = vmatpush.msra.mxu0 %v569
      %980 = vmatpush.msra.mxu0 %v556
      %981 = vmatpush.msra.mxu0 %v543
      %982 = vmatmul.f32.gmra.mxu0 %v329
      %v983 = vpop.f32.mrf.mxu0
      %v984 = vadd.f32 %v964, %v983
      %985 = vdwg.mxu0
      %986 = vmatpush.msra.mxu0 %v531
      %987 = vmatpush.msra.mxu0 %v518
      %988 = vmatpush.msra.mxu0 %v505
      %989 = vmatpush.msra.mxu0 %v492
      %990 = vmatpush.msra.mxu0 %v479
      %991 = vmatpush.msra.mxu0 %v466
      %992 = vmatpush.msra.mxu0 %v453
      %993 = vmatpush.msra.mxu0 %v440
      %994 = vmatpush.msra.mxu0 %v427
      %995 = vmatpush.msra.mxu0 %v414
      %996 = vmatpush.msra.mxu0 %v401
      %997 = vmatpush.msra.mxu0 %v388
      %998 = vmatpush.msra.mxu0 %v375
      %999 = vmatpush.msra.mxu0 %v362
      %1000 = vmatpush.msra.mxu0 %v349
      %1001 = vmatpush.msra.mxu0 %v336
      %1002 = vmatmul.f32.gmra.mxu0 %v328
      %v1003 = vpop.f32.mrf.mxu0
      %v1004 = vadd.f32 0.0, %v1003
      %1005 = vdwg.mxu0
      %1006 = vmatpush.msra.mxu0 %v739
      %1007 = vmatpush.msra.mxu0 %v726
      %1008 = vmatpush.msra.mxu0 %v713
      %1009 = vmatpush.msra.mxu0 %v700
      %1010 = vmatpush.msra.mxu0 %v687
      %1011 = vmatpush.msra.mxu0 %v674
      %1012 = vmatpush.msra.mxu0 %v661
      %1013 = vmatpush.msra.mxu0 %v648
      %1014 = vmatpush.msra.mxu0 %v635
      %1015 = vmatpush.msra.mxu0 %v622
      %1016 = vmatpush.msra.mxu0 %v609
      %1017 = vmatpush.msra.mxu0 %v596
      %1018 = vmatpush.msra.mxu0 %v583
      %1019 = vmatpush.msra.mxu0 %v570
      %1020 = vmatpush.msra.mxu0 %v557
      %1021 = vmatpush.msra.mxu0 %v544
      %1022 = vmatmul.f32.gmra.mxu0 %v329
      %v1023 = vpop.f32.mrf.mxu0
      %v1024 = vadd.f32 %v1004, %v1023
      %1025 = vdwg.mxu0
      %1026 = vmatpush.msra.mxu0 %v532
      %1027 = vmatpush.msra.mxu0 %v519
      %1028 = vmatpush.msra.mxu0 %v506
      %1029 = vmatpush.msra.mxu0 %v493
      %1030 = vmatpush.msra.mxu0 %v480
      %1031 = vmatpush.msra.mxu0 %v467
      %1032 = vmatpush.msra.mxu0 %v454
      %1033 = vmatpush.msra.mxu0 %v441
      %1034 = vmatpush.msra.mxu0 %v428
      %1035 = vmatpush.msra.mxu0 %v415
      %1036 = vmatpush.msra.mxu0 %v402
      %1037 = vmatpush.msra.mxu0 %v389
      %1038 = vmatpush.msra.mxu0 %v376
      %1039 = vmatpush.msra.mxu0 %v363
      %1040 = vmatpush.msra.mxu0 %v350
      %1041 = vmatpush.msra.mxu0 %v337
      %1042 = vmatmul.f32.gmra.mxu0 %v328
      %v1043 = vpop.f32.mrf.mxu0
      %v1044 = vadd.f32 0.0, %v1043
      %1045 = vdwg.mxu0
      %1046 = vmatpush.msra.mxu0 %v740
      %1047 = vmatpush.msra.mxu0 %v727
      %1048 = vmatpush.msra.mxu0 %v714
      %1049 = vmatpush.msra.mxu0 %v701
      %1050 = vmatpush.msra.mxu0 %v688
      %1051 = vmatpush.msra.mxu0 %v675
      %1052 = vmatpush.msra.mxu0 %v662
      %1053 = vmatpush.msra.mxu0 %v649
      %1054 = vmatpush.msra.mxu0 %v636
      %1055 = vmatpush.msra.mxu0 %v623
      %1056 = vmatpush.msra.mxu0 %v610
      %1057 = vmatpush.msra.mxu0 %v597
      %1058 = vmatpush.msra.mxu0 %v584
      %1059 = vmatpush.msra.mxu0 %v571
      %1060 = vmatpush.msra.mxu0 %v558
      %1061 = vmatpush.msra.mxu0 %v545
      %1062 = vmatmul.f32.gmra.mxu0 %v329
      %v1063 = vpop.f32.mrf.mxu0
      %v1064 = vadd.f32 %v1044, %v1063
      %1065 = vdwg.mxu0
      %1066 = vmatpush.msra.mxu0 %v533
      %1067 = vmatpush.msra.mxu0 %v520
      %1068 = vmatpush.msra.mxu0 %v507
      %1069 = vmatpush.msra.mxu0 %v494
      %1070 = vmatpush.msra.mxu0 %v481
      %1071 = vmatpush.msra.mxu0 %v468
      %1072 = vmatpush.msra.mxu0 %v455
      %1073 = vmatpush.msra.mxu0 %v442
      %1074 = vmatpush.msra.mxu0 %v429
      %1075 = vmatpush.msra.mxu0 %v416
      %1076 = vmatpush.msra.mxu0 %v403
      %1077 = vmatpush.msra.mxu0 %v390
      %1078 = vmatpush.msra.mxu0 %v377
      %1079 = vmatpush.msra.mxu0 %v364
      %1080 = vmatpush.msra.mxu0 %v351
      %1081 = vmatpush.msra.mxu0 %v338
      %1082 = vmatmul.f32.gmra.mxu0 %v328
      %v1083 = vpop.f32.mrf.mxu0
      %v1084 = vadd.f32 0.0, %v1083
      %1085 = vdwg.mxu0
      %1086 = vmatpush.msra.mxu0 %v741
      %1087 = vmatpush.msra.mxu0 %v728
      %1088 = vmatpush.msra.mxu0 %v715
      %1089 = vmatpush.msra.mxu0 %v702
      %1090 = vmatpush.msra.mxu0 %v689
      %1091 = vmatpush.msra.mxu0 %v676
      %1092 = vmatpush.msra.mxu0 %v663
      %1093 = vmatpush.msra.mxu0 %v650
      %1094 = vmatpush.msra.mxu0 %v637
      %1095 = vmatpush.msra.mxu0 %v624
      %1096 = vmatpush.msra.mxu0 %v611
      %1097 = vmatpush.msra.mxu0 %v598
      %1098 = vmatpush.msra.mxu0 %v585
      %1099 = vmatpush.msra.mxu0 %v572
      %1100 = vmatpush.msra.mxu0 %v559
      %1101 = vmatpush.msra.mxu0 %v546
      %1102 = vmatmul.f32.gmra.mxu0 %v329
      %v1103 = vpop.f32.mrf.mxu0
      %v1104 = vadd.f32 %v1084, %v1103
      %1105 = vdwg.mxu0
      %1106 = vmatpush.msra.mxu0 %v534
      %1107 = vmatpush.msra.mxu0 %v521
      %1108 = vmatpush.msra.mxu0 %v508
      %1109 = vmatpush.msra.mxu0 %v495
      %1110 = vmatpush.msra.mxu0 %v482
      %1111 = vmatpush.msra.mxu0 %v469
      %1112 = vmatpush.msra.mxu0 %v456
      %1113 = vmatpush.msra.mxu0 %v443
      %1114 = vmatpush.msra.mxu0 %v430
      %1115 = vmatpush.msra.mxu0 %v417
      %1116 = vmatpush.msra.mxu0 %v404
      %1117 = vmatpush.msra.mxu0 %v391
      %1118 = vmatpush.msra.mxu0 %v378
      %1119 = vmatpush.msra.mxu0 %v365
      %1120 = vmatpush.msra.mxu0 %v352
      %1121 = vmatpush.msra.mxu0 %v339
      %1122 = vmatmul.f32.gmra.mxu0 %v328
      %v1123 = vpop.f32.mrf.mxu0
      %v1124 = vadd.f32 0.0, %v1123
      %1125 = vdwg.mxu0
      %1126 = vmatpush.msra.mxu0 %v742
      %1127 = vmatpush.msra.mxu0 %v729
      %1128 = vmatpush.msra.mxu0 %v716
      %1129 = vmatpush.msra.mxu0 %v703
      %1130 = vmatpush.msra.mxu0 %v690
      %1131 = vmatpush.msra.mxu0 %v677
      %1132 = vmatpush.msra.mxu0 %v664
      %1133 = vmatpush.msra.mxu0 %v651
      %1134 = vmatpush.msra.mxu0 %v638
      %1135 = vmatpush.msra.mxu0 %v625
      %1136 = vmatpush.msra.mxu0 %v612
      %1137 = vmatpush.msra.mxu0 %v599
      %1138 = vmatpush.msra.mxu0 %v586
      %1139 = vmatpush.msra.mxu0 %v573
      %1140 = vmatpush.msra.mxu0 %v560
      %1141 = vmatpush.msra.mxu0 %v547
      %1142 = vmatmul.f32.gmra.mxu0 %v329
      %v1143 = vpop.f32.mrf.mxu0
      %v1144 = vadd.f32 %v1124, %v1143
      %1145 = vdwg.mxu0
      %1146 = vmatpush.msra.mxu0 %v535
      %1147 = vmatpush.msra.mxu0 %v522
      %1148 = vmatpush.msra.mxu0 %v509
      %1149 = vmatpush.msra.mxu0 %v496
      %1150 = vmatpush.msra.mxu0 %v483
      %1151 = vmatpush.msra.mxu0 %v470
      %1152 = vmatpush.msra.mxu0 %v457
      %1153 = vmatpush.msra.mxu0 %v444
      %1154 = vmatpush.msra.mxu0 %v431
      %1155 = vmatpush.msra.mxu0 %v418
      %1156 = vmatpush.msra.mxu0 %v405
      %1157 = vmatpush.msra.mxu0 %v392
      %1158 = vmatpush.msra.mxu0 %v379
      %1159 = vmatpush.msra.mxu0 %v366
      %1160 = vmatpush.msra.mxu0 %v353
      %1161 = vmatpush.msra.mxu0 %v340
      %1162 = vmatmul.f32.gmra.mxu0 %v328
      %v1163 = vpop.f32.mrf.mxu0
      %v1164 = vadd.f32 0.0, %v1163
      %1165 = vdwg.mxu0
      %1166 = vmatpush.msra.mxu0 %v743
      %1167 = vmatpush.msra.mxu0 %v730
      %1168 = vmatpush.msra.mxu0 %v717
      %1169 = vmatpush.msra.mxu0 %v704
      %1170 = vmatpush.msra.mxu0 %v691
      %1171 = vmatpush.msra.mxu0 %v678
      %1172 = vmatpush.msra.mxu0 %v665
      %1173 = vmatpush.msra.mxu0 %v652
      %1174 = vmatpush.msra.mxu0 %v639
      %1175 = vmatpush.msra.mxu0 %v626
      %1176 = vmatpush.msra.mxu0 %v613
      %1177 = vmatpush.msra.mxu0 %v600
      %1178 = vmatpush.msra.mxu0 %v587
      %1179 = vmatpush.msra.mxu0 %v574
      %1180 = vmatpush.msra.mxu0 %v561
      %1181 = vmatpush.msra.mxu0 %v548
      %1182 = vmatmul.f32.gmra.mxu0 %v329
      %v1183 = vpop.f32.mrf.mxu0
      %v1184 = vadd.f32 %v1164, %v1183
      %1185 = vdwg.mxu0
      %1186 = vmatpush.msra.mxu0 %v536
      %1187 = vmatpush.msra.mxu0 %v523
      %1188 = vmatpush.msra.mxu0 %v510
      %1189 = vmatpush.msra.mxu0 %v497
      %1190 = vmatpush.msra.mxu0 %v484
      %1191 = vmatpush.msra.mxu0 %v471
      %1192 = vmatpush.msra.mxu0 %v458
      %1193 = vmatpush.msra.mxu0 %v445
      %1194 = vmatpush.msra.mxu0 %v432
      %1195 = vmatpush.msra.mxu0 %v419
      %1196 = vmatpush.msra.mxu0 %v406
      %1197 = vmatpush.msra.mxu0 %v393
      %1198 = vmatpush.msra.mxu0 %v380
      %1199 = vmatpush.msra.mxu0 %v367
      %1200 = vmatpush.msra.mxu0 %v354
      %1201 = vmatpush.msra.mxu0 %v341
      %1202 = vmatmul.f32.gmra.mxu0 %v328
      %v1203 = vpop.f32.mrf.mxu0
      %v1204 = vadd.f32 0.0, %v1203
      %1205 = vdwg.mxu0
      %1206 = vmatpush.msra.mxu0 %v744
      %1207 = vmatpush.msra.mxu0 %v731
      %1208 = vmatpush.msra.mxu0 %v718
      %1209 = vmatpush.msra.mxu0 %v705
      %1210 = vmatpush.msra.mxu0 %v692
      %1211 = vmatpush.msra.mxu0 %v679
      %1212 = vmatpush.msra.mxu0 %v666
      %1213 = vmatpush.msra.mxu0 %v653
      %1214 = vmatpush.msra.mxu0 %v640
      %1215 = vmatpush.msra.mxu0 %v627
      %1216 = vmatpush.msra.mxu0 %v614
      %1217 = vmatpush.msra.mxu0 %v601
      %1218 = vmatpush.msra.mxu0 %v588
      %1219 = vmatpush.msra.mxu0 %v575
      %1220 = vmatpush.msra.mxu0 %v562
      %1221 = vmatpush.msra.mxu0 %v549
      %1222 = vmatmul.f32.gmra.mxu0 %v329
      %v1223 = vpop.f32.mrf.mxu0
      %v1224 = vadd.f32 %v1204, %v1223
      %1225 = vdwg.mxu0
      %1226 = vmatpush.msra.mxu0 %v537
      %1227 = vmatpush.msra.mxu0 %v524
      %1228 = vmatpush.msra.mxu0 %v511
      %1229 = vmatpush.msra.mxu0 %v498
      %1230 = vmatpush.msra.mxu0 %v485
      %1231 = vmatpush.msra.mxu0 %v472
      %1232 = vmatpush.msra.mxu0 %v459
      %1233 = vmatpush.msra.mxu0 %v446
      %1234 = vmatpush.msra.mxu0 %v433
      %1235 = vmatpush.msra.mxu0 %v420
      %1236 = vmatpush.msra.mxu0 %v407
      %1237 = vmatpush.msra.mxu0 %v394
      %1238 = vmatpush.msra.mxu0 %v381
      %1239 = vmatpush.msra.mxu0 %v368
      %1240 = vmatpush.msra.mxu0 %v355
      %1241 = vmatpush.msra.mxu0 %v342
      %1242 = vmatmul.f32.gmra.mxu0 %v328
      %v1243 = vpop.f32.mrf.mxu0
      %v1244 = vadd.f32 0.0, %v1243
      %1245 = vdwg.mxu0
      %1246 = vmatpush.msra.mxu0 %v745
      %1247 = vmatpush.msra.mxu0 %v732
      %1248 = vmatpush.msra.mxu0 %v719
      %1249 = vmatpush.msra.mxu0 %v706
      %1250 = vmatpush.msra.mxu0 %v693
      %1251 = vmatpush.msra.mxu0 %v680
      %1252 = vmatpush.msra.mxu0 %v667
      %1253 = vmatpush.msra.mxu0 %v654
      %1254 = vmatpush.msra.mxu0 %v641
      %1255 = vmatpush.msra.mxu0 %v628
      %1256 = vmatpush.msra.mxu0 %v615
      %1257 = vmatpush.msra.mxu0 %v602
      %1258 = vmatpush.msra.mxu0 %v589
      %1259 = vmatpush.msra.mxu0 %v576
      %1260 = vmatpush.msra.mxu0 %v563
      %1261 = vmatpush.msra.mxu0 %v550
      %1262 = vmatmul.f32.gmra.mxu0 %v329
      %v1263 = vpop.f32.mrf.mxu0
      %v1264 = vadd.f32 %v1244, %v1263
      %1265 = vdwg.mxu0
      %1267 = vrot.lane.b32.xlu0 %v784, 64
      %v1268 = vpop.permute.xlu0 %1267
      %1271 = vrot.lane.b32.xlu0 %v824, 64
      %v1272 = vpop.permute.xlu0 %1271
      %1275 = vrot.lane.b32.xlu0 %v864, 64
      %v1276 = vpop.permute.xlu0 %1275
      %1279 = vrot.lane.b32.xlu0 %v904, 64
      %v1280 = vpop.permute.xlu0 %1279
      %1283 = vrot.lane.b32.xlu0 %v944, 64
      %v1284 = vpop.permute.xlu0 %1283
      %1287 = vrot.lane.b32.xlu0 %v984, 64
      %v1288 = vpop.permute.xlu0 %1287
      %1291 = vrot.lane.b32.xlu0 %v1024, 64
      %v1292 = vpop.permute.xlu0 %1291
      %1295 = vrot.lane.b32.xlu0 %v1064, 64
      %v1296 = vpop.permute.xlu0 %1295
      %1299 = vrot.lane.b32.xlu0 %v1104, 64
      %v1300 = vpop.permute.xlu0 %1299
      %1303 = vrot.lane.b32.xlu0 %v1144, 64
      %v1304 = vpop.permute.xlu0 %1303
      %1307 = vrot.lane.b32.xlu0 %v1184, 64
      %v1308 = vpop.permute.xlu0 %1307
      %1311 = vrot.lane.b32.xlu0 %v1224, 64
      %v1312 = vpop.permute.xlu0 %1311
      %v1314 = vld [vmem:[%s3] sm:$0xff]
      %v1315 = vld [vmem:[%s3 + $0x8] sm:$0xff]
      %v1316 = vld [vmem:[%s3 + $0x10] sm:$0xff]
      %v1317 = vld [vmem:[%s3 + $0x18] sm:$0xff]
      %vm1318 = vcmask 654336
      %v1320 = vsel %vm1318, %v1315, 0
      %v1323 = vsel %vm1318, %v1317, 0
      %1325 = vmatpush.msra.mxu0 %v1296
      %1326 = vmatpush.msra.mxu0 %v1064
      %1327 = vmatpush.msra.mxu0 %v1292
      %1328 = vmatpush.msra.mxu0 %v1024
      %1329 = vmatpush.msra.mxu0 %v1288
      %1330 = vmatpush.msra.mxu0 %v984
      %1331 = vmatpush.msra.mxu0 %v1284
      %1332 = vmatpush.msra.mxu0 %v944
      %1333 = vmatpush.msra.mxu0 %v1280
      %1334 = vmatpush.msra.mxu0 %v904
      %1335 = vmatpush.msra.mxu0 %v1276
      %1336 = vmatpush.msra.mxu0 %v864
      %1337 = vmatpush.msra.mxu0 %v1272
      %1338 = vmatpush.msra.mxu0 %v824
      %1339 = vmatpush.msra.mxu0 %v1268
      %1340 = vmatpush.msra.mxu0 %v784
      %1341 = vmatmul.f32.gmra.mxu0 %v1314
      %v1342 = vpop.f32.mrf.mxu0
      %v1343 = vadd.f32 0.0, %v1342
      %1344 = vmatmul.f32.gmra.mxu0 %v1316
      %v1345 = vpop.f32.mrf.mxu0
      %v1346 = vadd.f32 0.0, %v1345
      %1347 = vdwg.mxu0
      %1348 = vmatpush.msra.mxu0 0.0
      %1349 = vmatpush.msra.mxu0 0.0
      %1350 = vmatpush.msra.mxu0 0.0
      %1351 = vmatpush.msra.mxu0 0.0
      %1352 = vmatpush.msra.mxu0 0.0
      %1353 = vmatpush.msra.mxu0 0.0
      %1354 = vmatpush.msra.mxu0 1.0
      %1355 = vmatpush.msra.mxu0 %v1264
      %1356 = vmatpush.msra.mxu0 %v1312
      %1357 = vmatpush.msra.mxu0 %v1224
      %1358 = vmatpush.msra.mxu0 %v1308
      %1359 = vmatpush.msra.mxu0 %v1184
      %1360 = vmatpush.msra.mxu0 %v1304
      %1361 = vmatpush.msra.mxu0 %v1144
      %1362 = vmatpush.msra.mxu0 %v1300
      %1363 = vmatpush.msra.mxu0 %v1104
      %1364 = vmatmul.f32.gmra.mxu0 %v1320
      %v1365 = vpop.f32.mrf.mxu0
      %v1366 = vadd.f32 %v1343, %v1365
      %1367 = vmatmul.f32.gmra.mxu0 %v1323
      %v1368 = vpop.f32.mrf.mxu0
      %v1369 = vadd.f32 %v1346, %v1368
      %1370 = vdwg.mxu0
      %v1371 = vmax.f32 %v1366, 0.0
      %v1372 = vmax.f32 %v1369, 0.0
      %v1373 = vld [vmem:[%s4] sm:$0xff]
      %v1374 = vld [vmem:[%s4 + $0x8] sm:$0xff]
      %v1375 = vld [vmem:[%s4 + $0x10] sm:$0xff]
      %v1376 = vld [vmem:[%s4 + $0x18] sm:$0xff]
      %v1377 = vld [vmem:[%s4 + $0x20] sm:$0xff]
      %v1378 = vld [vmem:[%s4 + $0x28] sm:$0xff]
      %v1379 = vld [vmem:[%s4 + $0x30] sm:$0xff]
      %v1380 = vld [vmem:[%s4 + $0x38] sm:$0xff]
      %v1381 = vld [vmem:[%s4 + $0x40] sm:$0xff]
      %v1382 = vld [vmem:[%s4 + $0x48] sm:$0xff]
      %v1383 = vld [vmem:[%s4 + $0x50] sm:$0xff]
      %v1384 = vld [vmem:[%s4 + $0x58] sm:$0xff]
      %v1385 = vld [vmem:[%s4 + $0x60] sm:$0xff]
      %v1386 = vld [vmem:[%s4 + $0x68] sm:$0xff]
      %v1387 = vld [vmem:[%s4 + $0x70] sm:$0xff]
      %v1388 = vld [vmem:[%s4 + $0x78] sm:$0xff]
      %v1389 = vld [vmem:[%s4 + $0x80] sm:$0xff]
      %v1390 = vld [vmem:[%s4 + $0x88] sm:$0xff]
      %v1391 = vld [vmem:[%s4 + $0x90] sm:$0xff]
      %v1392 = vld [vmem:[%s4 + $0x98] sm:$0xff]
      %v1393 = vld [vmem:[%s4 + $0xa0] sm:$0xff]
      %v1394 = vld [vmem:[%s4 + $0xa8] sm:$0xff]
      %v1395 = vld [vmem:[%s4 + $0xb0] sm:$0xff]
      %v1396 = vld [vmem:[%s4 + $0xb8] sm:$0xff]
      %v1397 = vld [vmem:[%s4 + $0xc0] sm:$0xff]
      %v1398 = vld [vmem:[%s4 + $0xc8] sm:$0xff]
      %v1399 = vld [vmem:[%s4 + $0xd0] sm:$0xff]
      %v1400 = vld [vmem:[%s4 + $0xd8] sm:$0xff]
      %v1401 = vld [vmem:[%s4 + $0xe0] sm:$0xff]
      %v1402 = vld [vmem:[%s4 + $0xe8] sm:$0xff]
      %v1403 = vld [vmem:[%s4 + $0xf0] sm:$0xff]
      %v1404 = vld [vmem:[%s4 + $0xf8] sm:$0xff]
      %vm1405 = vcmask 523264
      %v1407 = vsel %vm1405, %v1371, 0
      %v1410 = vsel %vm1405, %v1372, 0
      %1412 = vmatpush.msra.mxu0 0.0
      %1413 = vmatpush.msra.mxu0 0.0
      %1414 = vmatpush.msra.mxu0 0.0
      %1415 = vmatpush.msra.mxu0 0.0
      %1416 = vmatpush.msra.mxu0 0.0
      %1417 = vmatpush.msra.mxu0 0.0
      %1418 = vmatpush.msra.mxu0 0.0
      %1419 = vmatpush.msra.mxu0 0.0
      %1420 = vmatpush.msra.mxu0 %v1401
      %1421 = vmatpush.msra.mxu0 %v1397
      %1422 = vmatpush.msra.mxu0 %v1393
      %1423 = vmatpush.msra.mxu0 %v1389
      %1424 = vmatpush.msra.mxu0 %v1385
      %1425 = vmatpush.msra.mxu0 %v1381
      %1426 = vmatpush.msra.mxu0 %v1377
      %1427 = vmatpush.msra.mxu0 %v1373
      %1428 = vmatmul.f32.gmra.mxu0 %v1407
      %v1429 = vpop.f32.mrf.mxu0
      %v1430 = vadd.f32 0.0, %v1429
      %1431 = vmatmul.f32.gmra.mxu0 %v1410
      %v1432 = vpop.f32.mrf.mxu0
      %v1433 = vadd.f32 0.0, %v1432
      %1434 = vdwg.mxu0
      %1435 = vmatpush.msra.mxu0 0.0
      %1436 = vmatpush.msra.mxu0 0.0
      %1437 = vmatpush.msra.mxu0 0.0
      %1438 = vmatpush.msra.mxu0 0.0
      %1439 = vmatpush.msra.mxu0 0.0
      %1440 = vmatpush.msra.mxu0 0.0
      %1441 = vmatpush.msra.mxu0 0.0
      %1442 = vmatpush.msra.mxu0 0.0
      %1443 = vmatpush.msra.mxu0 %v1402
      %1444 = vmatpush.msra.mxu0 %v1398
      %1445 = vmatpush.msra.mxu0 %v1394
      %1446 = vmatpush.msra.mxu0 %v1390
      %1447 = vmatpush.msra.mxu0 %v1386
      %1448 = vmatpush.msra.mxu0 %v1382
      %1449 = vmatpush.msra.mxu0 %v1378
      %1450 = vmatpush.msra.mxu0 %v1374
      %1451 = vmatmul.f32.gmra.mxu0 %v1407
      %v1452 = vpop.f32.mrf.mxu0
      %v1453 = vadd.f32 0.0, %v1452
      %1454 = vmatmul.f32.gmra.mxu0 %v1410
      %v1455 = vpop.f32.mrf.mxu0
      %v1456 = vadd.f32 0.0, %v1455
      %1457 = vdwg.mxu0
      %1458 = vmatpush.msra.mxu0 0.0
      %1459 = vmatpush.msra.mxu0 0.0
      %1460 = vmatpush.msra.mxu0 0.0
      %1461 = vmatpush.msra.mxu0 0.0
      %1462 = vmatpush.msra.mxu0 0.0
      %1463 = vmatpush.msra.mxu0 0.0
      %1464 = vmatpush.msra.mxu0 0.0
      %1465 = vmatpush.msra.mxu0 0.0
      %1466 = vmatpush.msra.mxu0 %v1403
      %1467 = vmatpush.msra.mxu0 %v1399
      %1468 = vmatpush.msra.mxu0 %v1395
      %1469 = vmatpush.msra.mxu0 %v1391
      %1470 = vmatpush.msra.mxu0 %v1387
      %1471 = vmatpush.msra.mxu0 %v1383
      %1472 = vmatpush.msra.mxu0 %v1379
      %1473 = vmatpush.msra.mxu0 %v1375
      %1474 = vmatmul.f32.gmra.mxu0 %v1407
      %v1475 = vpop.f32.mrf.mxu0
      %v1476 = vadd.f32 0.0, %v1475
      %1477 = vmatmul.f32.gmra.mxu0 %v1410
      %v1478 = vpop.f32.mrf.mxu0
      %v1479 = vadd.f32 0.0, %v1478
      %1480 = vdwg.mxu0
      %1481 = vmatpush.msra.mxu0 0.0
      %1482 = vmatpush.msra.mxu0 0.0
      %1483 = vmatpush.msra.mxu0 0.0
      %1484 = vmatpush.msra.mxu0 0.0
      %1485 = vmatpush.msra.mxu0 0.0
      %1486 = vmatpush.msra.mxu0 0.0
      %1487 = vmatpush.msra.mxu0 0.0
      %1488 = vmatpush.msra.mxu0 0.0
      %1489 = vmatpush.msra.mxu0 %v1404
      %1490 = vmatpush.msra.mxu0 %v1400
      %1491 = vmatpush.msra.mxu0 %v1396
      %1492 = vmatpush.msra.mxu0 %v1392
      %1493 = vmatpush.msra.mxu0 %v1388
      %1494 = vmatpush.msra.mxu0 %v1384
      %1495 = vmatpush.msra.mxu0 %v1380
      %1496 = vmatpush.msra.mxu0 %v1376
      %1497 = vmatmul.f32.gmra.mxu0 %v1407
      %v1498 = vpop.f32.mrf.mxu0
      %v1499 = vadd.f32 0.0, %v1498
      %1500 = vmatmul.f32.gmra.mxu0 %v1410
      %v1501 = vpop.f32.mrf.mxu0
      %v1502 = vadd.f32 0.0, %v1501
      %1503 = vdwg.mxu0
      %1506 = vrot.lane.b32.xlu0 %v1430, 112
      %v1507 = vpop.permute.xlu0 %1506
      %1508 = vrot.lane.b32.xlu0 %v1433, 112
      %v1509 = vpop.permute.xlu0 %1508
      %1512 = vrot.lane.b32.xlu0 %v1430, 96
      %v1513 = vpop.permute.xlu0 %1512
      %1514 = vrot.lane.b32.xlu0 %v1433, 96
      %v1515 = vpop.permute.xlu0 %1514
      %1518 = vrot.lane.b32.xlu0 %v1430, 80
      %v1519 = vpop.permute.xlu0 %1518
      %1520 = vrot.lane.b32.xlu0 %v1433, 80
      %v1521 = vpop.permute.xlu0 %1520
      %1524 = vrot.lane.b32.xlu0 %v1430, 64
      %v1525 = vpop.permute.xlu0 %1524
      %1526 = vrot.lane.b32.xlu0 %v1433, 64
      %v1527 = vpop.permute.xlu0 %1526
      %1530 = vrot.lane.b32.xlu0 %v1430, 48
      %v1531 = vpop.permute.xlu0 %1530
      %1532 = vrot.lane.b32.xlu0 %v1433, 48
      %v1533 = vpop.permute.xlu0 %1532
      %1536 = vrot.lane.b32.xlu0 %v1430, 32
      %v1537 = vpop.permute.xlu0 %1536
      %1538 = vrot.lane.b32.xlu0 %v1433, 32
      %v1539 = vpop.permute.xlu0 %1538
      %1542 = vrot.lane.b32.xlu0 %v1430, 16
      %v1543 = vpop.permute.xlu0 %1542
      %1544 = vrot.lane.b32.xlu0 %v1433, 16
      %v1545 = vpop.permute.xlu0 %1544
      %1550 = vrot.lane.b32.xlu0 %v1453, 112
      %v1551 = vpop.permute.xlu0 %1550
      %1552 = vrot.lane.b32.xlu0 %v1456, 112
      %v1553 = vpop.permute.xlu0 %1552
      %1556 = vrot.lane.b32.xlu0 %v1453, 96
      %v1557 = vpop.permute.xlu0 %1556
      %1558 = vrot.lane.b32.xlu0 %v1456, 96
      %v1559 = vpop.permute.xlu0 %1558
      %1562 = vrot.lane.b32.xlu0 %v1453, 80
      %v1563 = vpop.permute.xlu0 %1562
      %1564 = vrot.lane.b32.xlu0 %v1456, 80
      %v1565 = vpop.permute.xlu0 %1564
      %1568 = vrot.lane.b32.xlu0 %v1453, 64
      %v1569 = vpop.permute.xlu0 %1568
      %1570 = vrot.lane.b32.xlu0 %v1456, 64
      %v1571 = vpop.permute.xlu0 %1570
      %1574 = vrot.lane.b32.xlu0 %v1453, 48
      %v1575 = vpop.permute.xlu0 %1574
      %1576 = vrot.lane.b32.xlu0 %v1456, 48
      %v1577 = vpop.permute.xlu0 %1576
      %1580 = vrot.lane.b32.xlu0 %v1453, 32
      %v1581 = vpop.permute.xlu0 %1580
      %1582 = vrot.lane.b32.xlu0 %v1456, 32
      %v1583 = vpop.permute.xlu0 %1582
      %1586 = vrot.lane.b32.xlu0 %v1453, 16
      %v1587 = vpop.permute.xlu0 %1586
      %1588 = vrot.lane.b32.xlu0 %v1456, 16
      %v1589 = vpop.permute.xlu0 %1588
      %1594 = vrot.lane.b32.xlu0 %v1476, 112
      %v1595 = vpop.permute.xlu0 %1594
      %1596 = vrot.lane.b32.xlu0 %v1479, 112
      %v1597 = vpop.permute.xlu0 %1596
      %1600 = vrot.lane.b32.xlu0 %v1476, 96
      %v1601 = vpop.permute.xlu0 %1600
      %1602 = vrot.lane.b32.xlu0 %v1479, 96
      %v1603 = vpop.permute.xlu0 %1602
      %1606 = vrot.lane.b32.xlu0 %v1476, 80
      %v1607 = vpop.permute.xlu0 %1606
      %1608 = vrot.lane.b32.xlu0 %v1479, 80
      %v1609 = vpop.permute.xlu0 %1608
      %1612 = vrot.lane.b32.xlu0 %v1476, 64
      %v1613 = vpop.permute.xlu0 %1612
      %1614 = vrot.lane.b32.xlu0 %v1479, 64
      %v1615 = vpop.permute.xlu0 %1614
      %1618 = vrot.lane.b32.xlu0 %v1476, 48
      %v1619 = vpop.permute.xlu0 %1618
      %1620 = vrot.lane.b32.xlu0 %v1479, 48
      %v1621 = vpop.permute.xlu0 %1620
      %1624 = vrot.lane.b32.xlu0 %v1476, 32
      %v1625 = vpop.permute.xlu0 %1624
      %1626 = vrot.lane.b32.xlu0 %v1479, 32
      %v1627 = vpop.permute.xlu0 %1626
      %1630 = vrot.lane.b32.xlu0 %v1476, 16
      %v1631 = vpop.permute.xlu0 %1630
      %1632 = vrot.lane.b32.xlu0 %v1479, 16
      %v1633 = vpop.permute.xlu0 %1632
      %v1636 = vld [vmem:[%s5] sm:$0xff]
      %v1637 = vld [vmem:[%s5 + $0x8] sm:$0xff]
      %v1638 = vld [vmem:[%s5 + $0x10] sm:$0xff]
      %v1639 = vld [vmem:[%s5 + $0x18] sm:$0xff]
      %v1640 = vld [vmem:[%s5 + $0x20] sm:$0xff]
      %v1641 = vld [vmem:[%s5 + $0x28] sm:$0xff]
      %v1642 = vld [vmem:[%s5 + $0x30] sm:$0xff]
      %v1643 = vld [vmem:[%s5 + $0x38] sm:$0xff]
      %v1644 = vld [vmem:[%s5 + $0x40] sm:$0xff]
      %v1645 = vld [vmem:[%s5 + $0x48] sm:$0xff]
      %v1646 = vld [vmem:[%s5 + $0x50] sm:$0xff]
      %v1647 = vld [vmem:[%s5 + $0x58] sm:$0xff]
      %v1648 = vld [vmem:[%s5 + $0x60] sm:$0xff]
      %v1649 = vld [vmem:[%s5 + $0x68] sm:$0xff]
      %v1650 = vld [vmem:[%s5 + $0x70] sm:$0xff]
      %v1651 = vld [vmem:[%s5 + $0x78] sm:$0xff]
      %vm1652 = vcmask 195584
      %v1654 = vsel %vm1652, %v1639, 0
      %v1657 = vsel %vm1652, %v1643, 0
      %v1660 = vsel %vm1652, %v1647, 0
      %v1663 = vsel %vm1652, %v1651, 0
      %1665 = vmatpush.msra.mxu0 %v1545
      %1666 = vmatpush.msra.mxu0 %v1543
      %1667 = vmatpush.msra.mxu0 %v1539
      %1668 = vmatpush.msra.mxu0 %v1537
      %1669 = vmatpush.msra.mxu0 %v1533
      %1670 = vmatpush.msra.mxu0 %v1531
      %1671 = vmatpush.msra.mxu0 %v1527
      %1672 = vmatpush.msra.mxu0 %v1525
      %1673 = vmatpush.msra.mxu0 %v1521
      %1674 = vmatpush.msra.mxu0 %v1519
      %1675 = vmatpush.msra.mxu0 %v1515
      %1676 = vmatpush.msra.mxu0 %v1513
      %1677 = vmatpush.msra.mxu0 %v1509
      %1678 = vmatpush.msra.mxu0 %v1507
      %1679 = vmatpush.msra.mxu0 %v1433
      %1680 = vmatpush.msra.mxu0 %v1430
      %1681 = vmatmul.f32.gmra.mxu0 %v1636
      %v1682 = vpop.f32.mrf.mxu0
      %v1683 = vadd.f32 0.0, %v1682
      %1684 = vmatmul.f32.gmra.mxu0 %v1640
      %v1685 = vpop.f32.mrf.mxu0
      %v1686 = vadd.f32 0.0, %v1685
      %1687 = vmatmul.f32.gmra.mxu0 %v1644
      %v1688 = vpop.f32.mrf.mxu0
      %v1689 = vadd.f32 0.0, %v1688
      %1690 = vmatmul.f32.gmra.mxu0 %v1648
      %v1691 = vpop.f32.mrf.mxu0
      %v1692 = vadd.f32 0.0, %v1691
      %1693 = vdwg.mxu0
      %1694 = vmatpush.msra.mxu0 %v1589
      %1695 = vmatpush.msra.mxu0 %v1587
      %1696 = vmatpush.msra.mxu0 %v1583
      %1697 = vmatpush.msra.mxu0 %v1581
      %1698 = vmatpush.msra.mxu0 %v1577
      %1699 = vmatpush.msra.mxu0 %v1575
      %1700 = vmatpush.msra.mxu0 %v1571
      %1701 = vmatpush.msra.mxu0 %v1569
      %1702 = vmatpush.msra.mxu0 %v1565
      %1703 = vmatpush.msra.mxu0 %v1563
      %1704 = vmatpush.msra.mxu0 %v1559
      %1705 = vmatpush.msra.mxu0 %v1557
      %1706 = vmatpush.msra.mxu0 %v1553
      %1707 = vmatpush.msra.mxu0 %v1551
      %1708 = vmatpush.msra.mxu0 %v1456
      %1709 = vmatpush.msra.mxu0 %v1453
      %1710 = vmatmul.f32.gmra.mxu0 %v1637
      %v1711 = vpop.f32.mrf.mxu0
      %v1712 = vadd.f32 %v1683, %v1711
      %1713 = vmatmul.f32.gmra.mxu0 %v1641
      %v1714 = vpop.f32.mrf.mxu0
      %v1715 = vadd.f32 %v1686, %v1714
      %1716 = vmatmul.f32.gmra.mxu0 %v1645
      %v1717 = vpop.f32.mrf.mxu0
      %v1718 = vadd.f32 %v1689, %v1717
      %1719 = vmatmul.f32.gmra.mxu0 %v1649
      %v1720 = vpop.f32.mrf.mxu0
      %v1721 = vadd.f32 %v1692, %v1720
      %1722 = vdwg.mxu0
      %1723 = vmatpush.msra.mxu0 %v1633
      %1724 = vmatpush.msra.mxu0 %v1631
      %1725 = vmatpush.msra.mxu0 %v1627
      %1726 = vmatpush.msra.mxu0 %v1625
      %1727 = vmatpush.msra.mxu0 %v1621
      %1728 = vmatpush.msra.mxu0 %v1619
      %1729 = vmatpush.msra.mxu0 %v1615
      %1730 = vmatpush.msra.mxu0 %v1613
      %1731 = vmatpush.msra.mxu0 %v1609
      %1732 = vmatpush.msra.mxu0 %v1607
      %1733 = vmatpush.msra.mxu0 %v1603
      %1734 = vmatpush.msra.mxu0 %v1601
      %1735 = vmatpush.msra.mxu0 %v1597
      %1736 = vmatpush.msra.mxu0 %v1595
      %1737 = vmatpush.msra.mxu0 %v1479
      %1738 = vmatpush.msra.mxu0 %v1476
      %1739 = vmatmul.f32.gmra.mxu0 %v1638
      %v1740 = vpop.f32.mrf.mxu0
      %v1741 = vadd.f32 %v1712, %v1740
      %1742 = vmatmul.f32.gmra.mxu0 %v1642
      %v1743 = vpop.f32.mrf.mxu0
      %v1744 = vadd.f32 %v1715, %v1743
      %1745 = vmatmul.f32.gmra.mxu0 %v1646
      %v1746 = vpop.f32.mrf.mxu0
      %v1747 = vadd.f32 %v1718, %v1746
      %1748 = vmatmul.f32.gmra.mxu0 %v1650
      %v1749 = vpop.f32.mrf.mxu0
      %v1750 = vadd.f32 %v1721, %v1749
      %1751 = vdwg.mxu0
      %1752 = vmatpush.msra.mxu0 0.0
      %1753 = vmatpush.msra.mxu0 0.0
      %1754 = vmatpush.msra.mxu0 0.0
      %1755 = vmatpush.msra.mxu0 0.0
      %1756 = vmatpush.msra.mxu0 0.0
      %1757 = vmatpush.msra.mxu0 0.0
      %1758 = vmatpush.msra.mxu0 0.0
      %1759 = vmatpush.msra.mxu0 0.0
      %1760 = vmatpush.msra.mxu0 0.0
      %1761 = vmatpush.msra.mxu0 0.0
      %1762 = vmatpush.msra.mxu0 0.0
      %1763 = vmatpush.msra.mxu0 0.0
      %1764 = vmatpush.msra.mxu0 0.0
      %1765 = vmatpush.msra.mxu0 1.0
      %1766 = vmatpush.msra.mxu0 %v1502
      %1767 = vmatpush.msra.mxu0 %v1499
      %1768 = vmatmul.f32.gmra.mxu0 %v1654
      %v1769 = vpop.f32.mrf.mxu0
      %v1770 = vadd.f32 %v1741, %v1769
      %1771 = vmatmul.f32.gmra.mxu0 %v1657
      %v1772 = vpop.f32.mrf.mxu0
      %v1773 = vadd.f32 %v1744, %v1772
      %1774 = vmatmul.f32.gmra.mxu0 %v1660
      %v1775 = vpop.f32.mrf.mxu0
      %v1776 = vadd.f32 %v1747, %v1775
      %1777 = vmatmul.f32.gmra.mxu0 %v1663
      %v1778 = vpop.f32.mrf.mxu0
      %v1779 = vadd.f32 %v1750, %v1778
      %1780 = vdwg.mxu0
      %v1781 = vmax.f32 %v1770, 0.0
      %v1782 = vmax.f32 %v1773, 0.0
      %v1783 = vmax.f32 %v1776, 0.0
      %v1784 = vmax.f32 %v1779, 0.0
      %v1785 = vld [vmem:[%s6] sm:$0xff]
      %v1786 = vld [vmem:[%s6 + $0x8] sm:$0xff]
      %1789 = vrot.lane.b32.xlu0 %v1785, 88
      %v1790 = vpop.permute.xlu0 %1789
      %1791 = vrot.lane.b32.xlu0 %v1786, 88
      %v1792 = vpop.permute.xlu0 %1791
      %v1796 = vsel %vm284, %v1781, 0
      %v1799 = vsel %vm284, %v1782, 0
      %v1802 = vsel %vm284, %v1783, 0
      %v1805 = vsel %vm284, %v1784, 0
      %1807 = vmatpush.msra.mxu0 0.0
      %1808 = vmatpush.msra.mxu0 0.0
      %1809 = vmatpush.msra.mxu0 0.0
      %1810 = vmatpush.msra.mxu0 0.0
      %1811 = vmatpush.msra.mxu0 0.0
      %1812 = vmatpush.msra.mxu0 0.0
      %1813 = vmatpush.msra.mxu0 0.0
      %1814 = vmatpush.msra.mxu0 0.0
      %1815 = vmatpush.msra.mxu0 0.0
      %1816 = vmatpush.msra.mxu0 0.0
      %1817 = vmatpush.msra.mxu0 0.0
      %1818 = vmatpush.msra.mxu0 0.0
      %1819 = vmatpush.msra.mxu0 0.0
      %1820 = vmatpush.msra.mxu0 0.0
      %1821 = vmatpush.msra.mxu0 %v1792
      %1822 = vmatpush.msra.mxu0 %v1790
      %1823 = vmatmul.f32.gmra.mxu0 %v1796
      %v1824 = vpop.f32.mrf.mxu0
      %v1825 = vadd.f32 0.0, %v1824
      %1826 = vmatmul.f32.gmra.mxu0 %v1799
      %v1827 = vpop.f32.mrf.mxu0
      %v1828 = vadd.f32 0.0, %v1827
      %1829 = vmatmul.f32.gmra.mxu0 %v1802
      %v1830 = vpop.f32.mrf.mxu0
      %v1831 = vadd.f32 0.0, %v1830
      %1832 = vmatmul.f32.gmra.mxu0 %v1805
      %v1833 = vpop.f32.mrf.mxu0
      %v1834 = vadd.f32 0.0, %v1833
      %1835 = vdwg.mxu0
      %vm1836 = vcmask 326656
      %v1837 = vsel %vm1836, %v1785, 0
      %v1839 = vsel %vm1836, %v1786, 0
      %1841 = vmatpush.msra.mxu0 0.0
      %1842 = vmatpush.msra.mxu0 0.0
      %1843 = vmatpush.msra.mxu0 0.0
      %1844 = vmatpush.msra.mxu0 0.0
      %1845 = vmatpush.msra.mxu0 0.0
      %1846 = vmatpush.msra.mxu0 0.0
      %1847 = vmatpush.msra.mxu0 0.0
      %1848 = vmatpush.msra.mxu0 0.0
      %1849 = vmatpush.msra.mxu0 0.0
      %1850 = vmatpush.msra.mxu0 0.0
      %1851 = vmatpush.msra.mxu0 0.0
      %1852 = vmatpush.msra.mxu0 1.0
      %1853 = vmatpush.msra.mxu0 %v1834
      %1854 = vmatpush.msra.mxu0 %v1831
      %1855 = vmatpush.msra.mxu0 %v1828
      %1856 = vmatpush.msra.mxu0 %v1825
      %1857 = vmatmul.f32.gmra.mxu0 %v1837
      %v1858 = vpop.f32.mrf.mxu0
      %v1859 = vadd.f32 0.0, %v1858
      %1860 = vmatmul.f32.gmra.mxu0 %v1839
      %v1861 = vpop.f32.mrf.mxu0
      %v1862 = vadd.f32 0.0, %v1861
      %1863 = vdwg.mxu0
      %vm1864 = vcmask 64512
      %1865 = vst.msk [vmem:[%s278] sm:$0xff] %vm1864, %v1859
      %1866 = vst.msk [vmem:[%s278 + $0x8] sm:$0xff] %vm1864, %v1862
      %p1867 = scmp.lt.s32.totalorder %s18, 1
      %s1868 = scalar_select %p1867, %s18, 1
      %s1869 = smul.addr %s1868, 2
      %s1870 = smul.addr %s1869, 8
      %s1871 = scalar_lea.vmem %s7, %s1870
      // Predicated region
      $region49: #{mnist_net_forward.1} parent=47 // pred_check
        %p1872 = pneg %p188
      $region50: #{mnist_net_forward.1} parent=47 // pred_check_branch
        %1874 = sbr.rel (%p1872) target = $region52
      $region51: #{mnist_net_forward.1} parent=47 // pred_region
        _
      $region52: #{mnist_net_forward.1} parent=47 // pred_fallthru
        _
    $region48: #{mnist_net_forward.1} parent=5 // pred_fallthru
      _
    %p1875 = scmp.le.s32.totalorder 2, %s13
    // Predicated region
    $region53: #{mnist_net_forward.1} parent=5 // pred_check
      %p1876 = pneg %p1875
    $region54: #{mnist_net_forward.1} parent=5 // pred_check_branch
      %1878 = sbr.rel (%p1876) target = $region56
    $region55: #{mnist_net_forward.1} parent=5 // pred_region
      %s1879 = ssub.s32 %s13, 2
      // Predicated region
      $region57: #{mnist_net_forward.1} parent=55 // pred_check
        %p1880 = pneg %p194
      $region58: #{mnist_net_forward.1} parent=55 // pred_check_branch
        %1882 = sbr.rel (%p1880) target = $region60
      $region59: #{mnist_net_forward.1} parent=55 // pred_region
        %p1883 = scmp.lt.s32.totalorder %s19, 1
        %s1884 = scalar_select %p1883, %s19, 1
        %s1885 = smul.addr %s1884, 2
        %s1886 = smul.addr %s1885, 8
        %s1887 = scalar_lea.vmem %s7, %s1886
      $region60: #{mnist_net_forward.1} parent=55 // pred_fallthru
        _
    $region56: #{mnist_net_forward.1} parent=5 // pred_fallthru
      _
  $region6: #{mnist_net_forward.1} parent=0 // loop_footer
    %s17 = sadd.s32 1, %s13
  $region7: #{mnist_net_forward.1} parent=0 // loop_footer_branch
    %12 = sbr.rel target = $region3
  $region8: #{mnist_net_forward.1} parent=0 // loop_exit
    _

</llo_original>
